<compile_context>
chip_gen: v7x
topology: tpu7x:2x2x1
jax: 0.10.0
libtpu: 0.0.40
codegen_flags: <defaults>
</compile_context>

<pallas_src>
import math

import jax
import jax.numpy as jnp
from jax import lax
from jax.experimental import pallas as pl
from jax.experimental.pallas import tpu as pltpu


def _gelu_exact(x):
    # nn.GELU() default = exact erf formulation (kept to preserve module semantics).
    return 0.5 * x * (1.0 + lax.erf(x * (1.0 / math.sqrt(2.0))))


def make_emb_conv_kernel(C, H, eps=1e-5):
    """Whole EmbConvBlock forward in a single VMEM-resident invocation."""

    def kernel(xcol_ref, w1bd_ref, g1_ref, be1_ref, w2_ref, g2_ref, be2_ref, out_ref):
        BT = out_ref.shape[0]

        # ---- conv1: single (BT, K*C) @ (K*C, C*H) MXU dot (bf16 in, f32 acc) ----
        acts = jnp.dot(xcol_ref[...], w1bd_ref[...],
                       preferred_element_type=jnp.float32)          # (BT, C*H) f32

        # ---- BN1 (training-mode) stats per hidden channel h over (B, T, C) ----
        # Single pass: sum and sum-of-squares, then fold the C column blocks.
        col_sum = jnp.sum(acts, axis=0, keepdims=True)               # (1, C*H)
        col_sq = jnp.sum(acts * acts, axis=0, keepdims=True)         # (1, C*H)
        s_h = col_sum[:, 0:H]
        q_h = col_sq[:, 0:H]
        for c in range(1, C):                                        # C is small & static
            s_h = s_h + col_sum[:, c * H:(c + 1) * H]
            q_h = q_h + col_sq[:, c * H:(c + 1) * H]
        inv_n1 = 1.0 / float(C * BT)
        mu1 = s_h * inv_n1                                           # (1, H)
        var1 = jnp.maximum(q_h * inv_n1 - mu1 * mu1, 0.0)            # biased variance
        inv1 = lax.rsqrt(var1 + eps)

        # Pre-fold BN1 affine: a_hat = acts * scale + shift  (one FMA per element).
        scale_h = inv1 * g1_ref[...]                                 # (1, H)
        shift_h = be1_ref[...] - mu1 * scale_h                       # (1, H)
        scale = jnp.concatenate([scale_h] * C, axis=-1)              # (1, C*H)
        shift = jnp.concatenate([shift_h] * C, axis=-1)              # (1, C*H)

        a = _gelu_exact(acts * scale + shift)                        # (BT, C*H) f32

        # ---- conv2: single (BT, C*H) @ (C*H, Ep) dot (bf16 in, f32 acc) ----
        y = jnp.dot(a.astype(jnp.bfloat16), w2_ref[...],
                    preferred_element_type=jnp.float32)              # (BT, Ep) f32

        # ---- BN2 (training-mode) stats over (B, T); padded columns stay exactly 0 ----
        inv_n2 = 1.0 / float(BT)
        mu2 = jnp.sum(y, axis=0, keepdims=True) * inv_n2             # (1, Ep)
        var2 = jnp.maximum(jnp.sum(y * y, axis=0, keepdims=True) * inv_n2 - mu2 * mu2, 0.0)
        scale2 = lax.rsqrt(var2 + eps) * g2_ref[...]
        shift2 = be2_ref[...] - mu2 * scale2

        out_ref[...] = _gelu_exact(y * scale2 + shift2)              # lane-dense store

    return kernel


def emb_conv_block(x, params, T_kernel_size):
    """x: (B, 1, T, C) float32 (PyTorch NCHW). Returns (B, 1, T, E)."""
    B, _, T, C = x.shape
    K = T_kernel_size
    w1, b1, g1, be1, w2, b2, g2, be2 = params
    H = w1.shape[1]
    E = w2.shape[-1]
    # Conv biases are absorbed exactly by the training-mode BN mean subtraction.
    del b1, b2

    # PyTorch padding='same' for the [K,1] conv: left = (K-1)//2, extra pad on right.
    pad_l = (K - 1) // 2
    pad_r = (K - 1) - pad_l
    xs = x[:, 0]                                                     # (B, T, C)
    xp = jnp.pad(xs, ((0, 0), (pad_l, pad_r), (0, 0)))               # (B, T+K-1, C)

    # Taps: xcol[b*T+t, k*C + c] = xp[b, t+k, c]  ->  (BT, K*C)
    xcol = jnp.concatenate([xp[:, k:k + T, :] for k in range(K)], axis=-1)
    xcol = xcol.reshape(B * T, K * C)
    # TODO(synk): for large T, form the K taps in-kernel from xp with shifted pl.ds
    # reads and add a B*T grid (two-phase BN reduction, dimension_semantics=
    # ("parallel",...)) so v7x's second TensorCore is used and HBM traffic is not
    # K-plicated by the wrapper-side im2col.

    # Block-diagonal conv1 weight: w1bd[k*C + c', c*H + h] = w1[k, h] * (c' == c),
    # so the fused dot's output columns are already ordered (c*H + h) for conv2.
    w1bd = jnp.einsum('kh,cd->kcdh', w1, jnp.eye(C, dtype=w1.dtype)).reshape(K * C, C * H)

    # Pad the tiny contraction dim K*C up to a multiple of 16 (bf16 sublane packing);
    # zero columns/rows do not change the result.
    D = K * C
    Dp = ((D + 15) // 16) * 16
    xcol = jnp.pad(xcol, ((0, 0), (0, Dp - D))).astype(jnp.bfloat16)
    w1bd = jnp.pad(w1bd, ((0, Dp - D), (0, 0))).astype(jnp.bfloat16)

    # Lane-dense output: pad E up to a multiple of 128 (padded cols come out exactly 0).
    Ep = ((E + 127) // 128) * 128
    w2p = jnp.pad(w2.reshape(C * H, E), ((0, 0), (0, Ep - E))).astype(jnp.bfloat16)
    g2p = jnp.pad(g2, ((0, 0), (0, Ep - E)))
    be2p = jnp.pad(be2, ((0, 0), (0, Ep - E)))

    kernel = make_emb_conv_kernel(C, H)
    vmem = pl.BlockSpec(memory_space=pltpu.MemorySpace.VMEM)

    out = pl.pallas_call(
        kernel,
        out_shape=jax.ShapeDtypeStruct((B * T, Ep), jnp.float32),
        in_specs=[vmem] * 7,
        out_specs=vmem,
    )(xcol, w1bd, g1, be1, w2p, g2p, be2p)

    # equivalent of torch.permute(out, (0, 3, 2, 1)): (B, E, T, 1) -> (B, 1, T, E)
    return out[:, :E].reshape(B, T, E)[:, None, :, :]


def init_params(key, in_channel, T_kernel_size, emb_size, hidden_size):
    """Deterministic parameter init; shapes follow the PyTorch module, stored in kernel layout."""
    C, K, E, H = in_channel, T_kernel_size, emb_size, hidden_size
    ks = jax.random.split(key, 8)

    # Conv2d(1, H, [K,1]): torch weight (H, 1, K, 1) -> kernel layout (K, H)
    fan1 = 1 * K * 1
    w1 = jax.random.uniform(ks[0], (K, H), jnp.float32, -1.0, 1.0) / math.sqrt(fan1)
    b1 = jax.random.uniform(ks[1], (1, H), jnp.float32, -1.0, 1.0) / math.sqrt(fan1)

    # Conv2d(H, E, [1,C]): torch weight (E, H, 1, C) -> kernel layout (C, H, E)
    fan2 = H * 1 * C
    w2 = jax.random.uniform(ks[2], (C, H, E), jnp.float32, -1.0, 1.0) / math.sqrt(fan2)
    b2 = jax.random.uniform(ks[3], (1, E), jnp.float32, -1.0, 1.0) / math.sqrt(fan2)

    # BatchNorm affine params (PyTorch default weight=1, bias=0; perturbed
    # deterministically so the affine path is exercised).
    g1 = jnp.ones((1, H), jnp.float32) + 0.1 * jax.random.normal(ks[4], (1, H), jnp.float32)
    be1 = 0.1 * jax.random.normal(ks[5], (1, H), jnp.float32)
    g2 = jnp.ones((1, E), jnp.float32) + 0.1 * jax.random.normal(ks[6], (1, E), jnp.float32)
    be2 = 0.1 * jax.random.normal(ks[7], (1, E), jnp.float32)

    return (w1, b1, g1, be1, w2, b2, g2, be2)


if __name__ == "__main__":
    B, C, T = 2, 4, 16          # batch, in_channel, time
    K = 3                       # T_kernel_size
    E = 64                      # emb_size
    H = 64 * 4                  # hidden_size (module default)

    key = jax.random.PRNGKey(0)
    kx, kp = jax.random.split(key)
    x = jax.random.normal(kx, (B, 1, T, C), jnp.float32)   # PyTorch NCHW: (B, 1, T, in_channel)
    params = init_params(kp, C, K, E, H)

    out = emb_conv_block(x, params, K)
    out = jax.block_until_ready(out)
    assert out.shape == (B, 1, T, E) and out.dtype == jnp.float32
    print("KERNEL_OK")
</pallas_src>

<mosaic_0001>
module attributes {stable_mosaic.version = 11 : i64} {
  func.func @kernel(%arg0: memref<32x16xbf16, #tpu.memory_space<vmem>>, %arg1: memref<16x1024xbf16, #tpu.memory_space<vmem>>, %arg2: memref<1x256xf32, #tpu.memory_space<vmem>>, %arg3: memref<1x256xf32, #tpu.memory_space<vmem>>, %arg4: memref<1024x128xbf16, #tpu.memory_space<vmem>>, %arg5: memref<1x128xf32, #tpu.memory_space<vmem>>, %arg6: memref<1x128xf32, #tpu.memory_space<vmem>>, %arg7: memref<32x128xf32, #tpu.memory_space<vmem>>) attributes {dimension_semantics = [], scalar_prefetch = 0 : i64, scratch_operands = 0 : i64, tpu.core_type = #tpu.core_type<tc>} {
    %c0 = arith.constant 0 : index
    %c0_0 = arith.constant 0 : index
    %0 = vector.load %arg0[%c0, %c0_0] : memref<32x16xbf16, #tpu.memory_space<vmem>>, vector<32x16xbf16>
    %c0_1 = arith.constant 0 : index
    %c0_2 = arith.constant 0 : index
    %1 = vector.load %arg1[%c0_1, %c0_2] : memref<16x1024xbf16, #tpu.memory_space<vmem>>, vector<16x1024xbf16>
    %cst = arith.constant dense<0.000000e+00> : vector<32x1024xf32>
    %2 = tpu.matmul %0, %1, %cst {dimension_numbers = #tpu.dot_dimension_numbers<[1], [0], [0], [1], [0, 0, 1, 1], [], []>} : vector<32x16xbf16>, vector<16x1024xbf16>, vector<32x1024xf32> -> vector<32x1024xf32>
    %cst_3 = arith.constant dense<0.000000e+00> : vector<1024xf32>
    %3 = vector.multi_reduction <add>, %2, %cst_3 [0] : vector<32x1024xf32> to vector<1024xf32>
    %4 = vector.shape_cast %3 : vector<1024xf32> to vector<1x1024xf32>
    %5 = arith.mulf %2, %2 : vector<32x1024xf32>
    %cst_4 = arith.constant dense<0.000000e+00> : vector<1024xf32>
    %6 = vector.multi_reduction <add>, %5, %cst_4 [0] : vector<32x1024xf32> to vector<1024xf32>
    %7 = vector.shape_cast %6 : vector<1024xf32> to vector<1x1024xf32>
    %8 = vector.extract_strided_slice %4 {offsets = [0, 0], sizes = [1, 256], strides = [1, 1]} : vector<1x1024xf32> to vector<1x256xf32>
    %9 = vector.extract_strided_slice %7 {offsets = [0, 0], sizes = [1, 256], strides = [1, 1]} : vector<1x1024xf32> to vector<1x256xf32>
    %10 = vector.extract_strided_slice %4 {offsets = [0, 256], sizes = [1, 256], strides = [1, 1]} : vector<1x1024xf32> to vector<1x256xf32>
    %11 = arith.addf %8, %10 : vector<1x256xf32>
    %12 = vector.extract_strided_slice %7 {offsets = [0, 256], sizes = [1, 256], strides = [1, 1]} : vector<1x1024xf32> to vector<1x256xf32>
    %13 = arith.addf %9, %12 : vector<1x256xf32>
    %14 = vector.extract_strided_slice %4 {offsets = [0, 512], sizes = [1, 256], strides = [1, 1]} : vector<1x1024xf32> to vector<1x256xf32>
    %15 = arith.addf %11, %14 : vector<1x256xf32>
    %16 = vector.extract_strided_slice %7 {offsets = [0, 512], sizes = [1, 256], strides = [1, 1]} : vector<1x1024xf32> to vector<1x256xf32>
    %17 = arith.addf %13, %16 : vector<1x256xf32>
    %18 = vector.extract_strided_slice %4 {offsets = [0, 768], sizes = [1, 256], strides = [1, 1]} : vector<1x1024xf32> to vector<1x256xf32>
    %19 = arith.addf %15, %18 : vector<1x256xf32>
    %20 = vector.extract_strided_slice %7 {offsets = [0, 768], sizes = [1, 256], strides = [1, 1]} : vector<1x1024xf32> to vector<1x256xf32>
    %21 = arith.addf %17, %20 : vector<1x256xf32>
    %cst_5 = arith.constant 7.812500e-03 : f32
    %22 = vector.broadcast %cst_5 : f32 to vector<1x256xf32>
    %23 = arith.mulf %19, %22 : vector<1x256xf32>
    %cst_6 = arith.constant 7.812500e-03 : f32
    %24 = vector.broadcast %cst_6 : f32 to vector<1x256xf32>
    %25 = arith.mulf %21, %24 : vector<1x256xf32>
    %26 = arith.mulf %23, %23 : vector<1x256xf32>
    %27 = arith.subf %25, %26 : vector<1x256xf32>
    %cst_7 = arith.constant 0.000000e+00 : f32
    %28 = vector.broadcast %cst_7 : f32 to vector<1x256xf32>
    %29 = arith.maximumf %27, %28 : vector<1x256xf32>
    %cst_8 = arith.constant 9.99999974E-6 : f32
    %30 = vector.broadcast %cst_8 : f32 to vector<1x256xf32>
    %31 = arith.addf %29, %30 : vector<1x256xf32>
    %32 = math.rsqrt %31 : vector<1x256xf32>
    %c0_9 = arith.constant 0 : index
    %c0_10 = arith.constant 0 : index
    %33 = vector.load %arg2[%c0_9, %c0_10] : memref<1x256xf32, #tpu.memory_space<vmem>>, vector<1x256xf32>
    %34 = arith.mulf %32, %33 : vector<1x256xf32>
    %c0_11 = arith.constant 0 : index
    %c0_12 = arith.constant 0 : index
    %35 = vector.load %arg3[%c0_11, %c0_12] : memref<1x256xf32, #tpu.memory_space<vmem>>, vector<1x256xf32>
    %36 = arith.mulf %23, %34 : vector<1x256xf32>
    %37 = arith.subf %35, %36 : vector<1x256xf32>
    %38 = tpu.concatenate %34, %34, %34, %34 in 1 : vector<1x256xf32>, vector<1x256xf32>, vector<1x256xf32>, vector<1x256xf32> -> vector<1x1024xf32>
    %39 = tpu.concatenate %37, %37, %37, %37 in 1 : vector<1x256xf32>, vector<1x256xf32>, vector<1x256xf32>, vector<1x256xf32> -> vector<1x1024xf32>
    %40 = vector.broadcast %38 : vector<1x1024xf32> to vector<32x1024xf32>
    %41 = arith.mulf %2, %40 : vector<32x1024xf32>
    %42 = vector.broadcast %39 : vector<1x1024xf32> to vector<32x1024xf32>
    %43 = arith.addf %41, %42 : vector<32x1024xf32>
    %cst_13 = arith.constant 5.000000e-01 : f32
    %44 = vector.broadcast %cst_13 : f32 to vector<32x1024xf32>
    %45 = arith.mulf %44, %43 : vector<32x1024xf32>
    %cst_14 = arith.constant 0.707106769 : f32
    %46 = vector.broadcast %cst_14 : f32 to vector<32x1024xf32>
    %47 = arith.mulf %43, %46 : vector<32x1024xf32>
    %48 = math.erf %47 : vector<32x1024xf32>
    %cst_15 = arith.constant 1.000000e+00 : f32
    %49 = vector.broadcast %cst_15 : f32 to vector<32x1024xf32>
    %50 = arith.addf %49, %48 : vector<32x1024xf32>
    %51 = arith.mulf %45, %50 : vector<32x1024xf32>
    %52 = arith.truncf %51 : vector<32x1024xf32> to vector<32x1024xbf16>
    %c0_16 = arith.constant 0 : index
    %c0_17 = arith.constant 0 : index
    %53 = vector.load %arg4[%c0_16, %c0_17] : memref<1024x128xbf16, #tpu.memory_space<vmem>>, vector<1024x128xbf16>
    %cst_18 = arith.constant dense<0.000000e+00> : vector<32x128xf32>
    %54 = tpu.matmul %52, %53, %cst_18 {dimension_numbers = #tpu.dot_dimension_numbers<[1], [0], [0], [1], [0, 0, 1, 1], [], []>} : vector<32x1024xbf16>, vector<1024x128xbf16>, vector<32x128xf32> -> vector<32x128xf32>
    %cst_19 = arith.constant dense<0.000000e+00> : vector<128xf32>
    %55 = vector.multi_reduction <add>, %54, %cst_19 [0] : vector<32x128xf32> to vector<128xf32>
    %56 = vector.shape_cast %55 : vector<128xf32> to vector<1x128xf32>
    %cst_20 = arith.constant 3.125000e-02 : f32
    %57 = vector.broadcast %cst_20 : f32 to vector<1x128xf32>
    %58 = arith.mulf %56, %57 : vector<1x128xf32>
    %59 = arith.mulf %54, %54 : vector<32x128xf32>
    %cst_21 = arith.constant dense<0.000000e+00> : vector<128xf32>
    %60 = vector.multi_reduction <add>, %59, %cst_21 [0] : vector<32x128xf32> to vector<128xf32>
    %61 = vector.shape_cast %60 : vector<128xf32> to vector<1x128xf32>
    %cst_22 = arith.constant 3.125000e-02 : f32
    %62 = vector.broadcast %cst_22 : f32 to vector<1x128xf32>
    %63 = arith.mulf %61, %62 : vector<1x128xf32>
    %64 = arith.mulf %58, %58 : vector<1x128xf32>
    %65 = arith.subf %63, %64 : vector<1x128xf32>
    %cst_23 = arith.constant 0.000000e+00 : f32
    %66 = vector.broadcast %cst_23 : f32 to vector<1x128xf32>
    %67 = arith.maximumf %65, %66 : vector<1x128xf32>
    %cst_24 = arith.constant 9.99999974E-6 : f32
    %68 = vector.broadcast %cst_24 : f32 to vector<1x128xf32>
    %69 = arith.addf %67, %68 : vector<1x128xf32>
    %70 = math.rsqrt %69 : vector<1x128xf32>
    %c0_25 = arith.constant 0 : index
    %c0_26 = arith.constant 0 : index
    %71 = vector.load %arg5[%c0_25, %c0_26] : memref<1x128xf32, #tpu.memory_space<vmem>>, vector<1x128xf32>
    %72 = arith.mulf %70, %71 : vector<1x128xf32>
    %c0_27 = arith.constant 0 : index
    %c0_28 = arith.constant 0 : index
    %73 = vector.load %arg6[%c0_27, %c0_28] : memref<1x128xf32, #tpu.memory_space<vmem>>, vector<1x128xf32>
    %74 = arith.mulf %58, %72 : vector<1x128xf32>
    %75 = arith.subf %73, %74 : vector<1x128xf32>
    %76 = vector.broadcast %72 : vector<1x128xf32> to vector<32x128xf32>
    %77 = arith.mulf %54, %76 : vector<32x128xf32>
    %78 = vector.broadcast %75 : vector<1x128xf32> to vector<32x128xf32>
    %79 = arith.addf %77, %78 : vector<32x128xf32>
    %cst_29 = arith.constant 5.000000e-01 : f32
    %80 = vector.broadcast %cst_29 : f32 to vector<32x128xf32>
    %81 = arith.mulf %80, %79 : vector<32x128xf32>
    %cst_30 = arith.constant 0.707106769 : f32
    %82 = vector.broadcast %cst_30 : f32 to vector<32x128xf32>
    %83 = arith.mulf %79, %82 : vector<32x128xf32>
    %84 = math.erf %83 : vector<32x128xf32>
    %cst_31 = arith.constant 1.000000e+00 : f32
    %85 = vector.broadcast %cst_31 : f32 to vector<32x128xf32>
    %86 = arith.addf %85, %84 : vector<32x128xf32>
    %87 = arith.mulf %81, %86 : vector<32x128xf32>
    %c0_32 = arith.constant 0 : index
    %c0_33 = arith.constant 0 : index
    %88 = vector.load %arg7[%c0_32, %c0_33] : memref<32x128xf32, #tpu.memory_space<vmem>>, vector<32x128xf32>
    tpu.vector_store %arg7[%c0_32, %c0_33], %87 {strides = array<i32>} : memref<32x128xf32, #tpu.memory_space<vmem>>, vector<32x128xf32>,
    return
  }
}

</mosaic_0001>

<llo_original>
// kernel: tpu_custom_call.1
$region0: #{tpu_custom_call.1}
  #allocation0 [shape = 'u32[]', space=smem, size = 0x4, offset = 0x4, fixed_abs, tag = 'smem constant byte address 0x4 - core index']
  #allocation1 [shape = 'u32[144,128]{1,0:T(1,128)}', space=vmem, size = 0x12000, scoped, tag = 'internal scratch']
  %s0 = inlined_call_operand.vmem [shape: bf16[32,16], index: 0, kind: input, shape index: {}]
  %s1 = inlined_call_operand.hbm [shape: bf16[16,1024], index: 1, kind: input, shape index: {}]
  %s2 = inlined_call_operand.vmem [shape: f32[1,256], index: 2, kind: input, shape index: {}]
  %s3 = inlined_call_operand.vmem [shape: f32[1,256], index: 3, kind: input, shape index: {}]
  %s4 = inlined_call_operand.hbm [shape: bf16[1024,128], index: 4, kind: input, shape index: {}]
  %s5 = inlined_call_operand.vmem [shape: f32[1,128], index: 5, kind: input, shape index: {}]
  %s6 = inlined_call_operand.vmem [shape: f32[1,128], index: 6, kind: input, shape index: {}]
  %s7 = inlined_call_operand.hbm [shape: f32[32,128], index: 7, kind: output, shape index: {}]
  %s8 = sld [smem:[#allocation0]]
  $region46: #{tpu_custom_call.1} parent=0
    _
  %s10 = ssub.s32 1, %s8
  %s11 = scalar_select 0, %s10, %s8
  $region1: #{tpu_custom_call.1} parent=0
    #allocation2 [shape = 'u8[32768]{0}', space=vmem, size = 0x8000, scoped, tag = 'input window, operand 1, single buffered']
    #allocation3 [shape = 's32[1]{0}', space=sflag, size = 0x4, scoped, tag = 'scoped memory for tpu_custom_call.1']
    #allocation4 [shape = 's32[1]{0}', space=sflag, size = 0x4, scoped, tag = 'scoped memory for tpu_custom_call.1']
    #allocation5 [shape = 'u8[262144]{0}', space=vmem, size = 0x40000, scoped, tag = 'input window, operand 4, single buffered']
    #allocation6 [shape = 's32[1]{0}', space=sflag, size = 0x4, scoped, tag = 'scoped memory for tpu_custom_call.1']
    #allocation7 [shape = 'u8[16384]{0}', space=vmem, size = 0x4000, scoped, tag = 'output window, operand 0, single buffered']
    %12 = vsyncpa [#allocation3], 0
    %13 = vsyncpa [#allocation6], 0
    %14 = vsyncpa [#allocation4], 0
    // Predicated region
    $region2: #{tpu_custom_call.1} parent=1 // pred_check
      _
    $region3: #{tpu_custom_call.1} parent=1 // pred_check_branch
      %16 = sbr.rel (0) target = $region5
    $region4: #{tpu_custom_call.1} parent=1 // pred_region
      _
    $region5: #{tpu_custom_call.1} parent=1 // pred_fallthru
      _
    // Predicated region
    $region6: #{tpu_custom_call.1} parent=1 // pred_check
      _
    $region7: #{tpu_custom_call.1} parent=1 // pred_check_branch
      %18 = sbr.rel (0) target = $region9
    $region8: #{tpu_custom_call.1} parent=1 // pred_region
      %s20 = ssub.s32 1024, 1024
      %21 = vsyncadd [#allocation3], %s20
      %s22 = sshll.u32 [#allocation2], 4
      %s23 = int_to_ptr.vmem [resolvable:$true] %s22
      %28 = dma.hbm_to_vmem [thread:$0]  %s1, 1024, %s23, [#allocation3], 512, 512, 32
    $region9: #{tpu_custom_call.1} parent=1 // pred_fallthru
      _
    // Predicated region
    $region10: #{tpu_custom_call.1} parent=1 // pred_check
      _
    $region11: #{tpu_custom_call.1} parent=1 // pred_check_branch
      %30 = sbr.rel (0) target = $region13
    $region12: #{tpu_custom_call.1} parent=1 // pred_region
      _
    $region13: #{tpu_custom_call.1} parent=1 // pred_fallthru
      _
    // Predicated region
    $region14: #{tpu_custom_call.1} parent=1 // pred_check
      _
    $region15: #{tpu_custom_call.1} parent=1 // pred_check_branch
      %32 = sbr.rel (0) target = $region17
    $region16: #{tpu_custom_call.1} parent=1 // pred_region
      _
    $region17: #{tpu_custom_call.1} parent=1 // pred_fallthru
      _
    // Predicated region
    $region18: #{tpu_custom_call.1} parent=1 // pred_check
      _
    $region19: #{tpu_custom_call.1} parent=1 // pred_check_branch
      %34 = sbr.rel (0) target = $region21
    $region20: #{tpu_custom_call.1} parent=1 // pred_region
      %s36 = ssub.s32 8192, 8192
      %37 = vsyncadd [#allocation6], %s36
      %s38 = sshll.u32 [#allocation5], 4
      %s39 = int_to_ptr.vmem [resolvable:$true] %s38
      %44 = dma.hbm_to_vmem [thread:$0]  %s4, 8192, %s39, [#allocation6], 64, 64, 4
    $region21: #{tpu_custom_call.1} parent=1 // pred_fallthru
      _
    // Predicated region
    $region22: #{tpu_custom_call.1} parent=1 // pred_check
      _
    $region23: #{tpu_custom_call.1} parent=1 // pred_check_branch
      %46 = sbr.rel (0) target = $region25
    $region24: #{tpu_custom_call.1} parent=1 // pred_region
      _
    $region25: #{tpu_custom_call.1} parent=1 // pred_fallthru
      _
    // Predicated region
    $region26: #{tpu_custom_call.1} parent=1 // pred_check
      _
    $region27: #{tpu_custom_call.1} parent=1 // pred_check_branch
      %48 = sbr.rel (0) target = $region29
    $region28: #{tpu_custom_call.1} parent=1 // pred_region
      _
    $region29: #{tpu_custom_call.1} parent=1 // pred_fallthru
      _
    // Predicated region
    $region30: #{tpu_custom_call.1} parent=1 // pred_check
      _
    $region31: #{tpu_custom_call.1} parent=1 // pred_check_branch
      %50 = sbr.rel (0) target = $region33
    $region32: #{tpu_custom_call.1} parent=1 // pred_region
      %51 = dma.done [#allocation3], 1024
    $region33: #{tpu_custom_call.1} parent=1 // pred_fallthru
      _
    // Predicated region
    $region34: #{tpu_custom_call.1} parent=1 // pred_check
      _
    $region35: #{tpu_custom_call.1} parent=1 // pred_check_branch
      %53 = sbr.rel (0) target = $region37
    $region36: #{tpu_custom_call.1} parent=1 // pred_region
      %54 = dma.done [#allocation6], 8192
    $region37: #{tpu_custom_call.1} parent=1 // pred_fallthru
      _
    %v56 = vld [vmem:[%s0] sm:$0xf]
    %v57 = vld [vmem:[%s0 + $0x4] sm:$0xf]
    %v58 = vld [vmem:[%s0 + $0x8] sm:$0xf]
    %v59 = vld [vmem:[%s0 + $0xc] sm:$0xf]
    %v60 = vld [vmem:[#allocation2] sm:$0xff]
    %v61 = vld [vmem:[#allocation2 + $0x8] sm:$0xff]
    %v62 = vld [vmem:[#allocation2 + $0x10] sm:$0xff]
    %v63 = vld [vmem:[#allocation2 + $0x18] sm:$0xff]
    %v64 = vld [vmem:[#allocation2 + $0x20] sm:$0xff]
    %v65 = vld [vmem:[#allocation2 + $0x28] sm:$0xff]
    %v66 = vld [vmem:[#allocation2 + $0x30] sm:$0xff]
    %v67 = vld [vmem:[#allocation2 + $0x38] sm:$0xff]
    %v72 = vunpack.c.l.b16 %v56
    %v73 = vunpack.c.l.b16 %v57
    %v74 = vunpack.c.l.b16 %v58
    %v75 = vunpack.c.l.b16 %v59
    %v76 = vpack.c.b16 %v73, %v72
    %v77 = vpack.c.b16 %v75, %v74
    %v86 = vunpack.c.l.b16 %v60
    %v87 = vunpack.c.h.b16 %v60
    %v88 = vunpack.c.l.b16 %v61
    %v89 = vunpack.c.h.b16 %v61
    %v90 = vunpack.c.l.b16 %v62
    %v91 = vunpack.c.h.b16 %v62
    %v92 = vunpack.c.l.b16 %v63
    %v93 = vunpack.c.h.b16 %v63
    %v94 = vunpack.c.l.b16 %v64
    %v95 = vunpack.c.h.b16 %v64
    %v96 = vunpack.c.l.b16 %v65
    %v97 = vunpack.c.h.b16 %v65
    %v98 = vunpack.c.l.b16 %v66
    %v99 = vunpack.c.h.b16 %v66
    %v100 = vunpack.c.l.b16 %v67
    %v101 = vunpack.c.h.b16 %v67
    %v102 = vpack.c.b16 %v94, %v86
    %v103 = vpack.c.b16 %v95, %v87
    %v104 = vpack.c.b16 %v96, %v88
    %v105 = vpack.c.b16 %v97, %v89
    %v106 = vpack.c.b16 %v98, %v90
    %v107 = vpack.c.b16 %v99, %v91
    %v108 = vpack.c.b16 %v100, %v92
    %v109 = vpack.c.b16 %v101, %v93
    %vm118 = vcmask 130048
    %v120 = vsel %vm118, %v76, 0
    %v123 = vsel %vm118, %v77, 0
    %125 = vmatprep.subr.bf16.mxu0 %v103
    %126 = vmatpush1.bf16.msra.mxu0 %v102
    %127 = vmatprep.subr.bf16.mxu0 0
    %128 = vmatpush1.bf16.msra.mxu0 0
    %129 = vmatprep.subr.bf16.mxu0 0
    %130 = vmatpush1.bf16.msra.mxu0 0
    %131 = vmatprep.subr.bf16.mxu0 0
    %132 = vmatpush1.bf16.msra.mxu0 0
    %133 = vmatprep.subr.bf16.mxu0 0
    %134 = vmatpush1.bf16.msra.mxu0 0
    %135 = vmatprep.subr.bf16.mxu0 0
    %136 = vmatpush1.bf16.msra.mxu0 0
    %137 = vmatprep.subr.bf16.mxu0 0
    %138 = vmatpush1.bf16.msra.mxu0 0
    %139 = vmatprep.subr.bf16.mxu0 0
    %140 = vmatpush1.bf16.msra.mxu0 0
    %141 = vmatprep.subr.bf16.mxu0 0
    %142 = vmatpush1.bf16.msra.mxu0 0
    %143 = vmatprep.subr.bf16.mxu0 0
    %144 = vmatpush1.bf16.msra.mxu0 0
    %145 = vmatprep.subr.bf16.mxu0 0
    %146 = vmatpush1.bf16.msra.mxu0 0
    %147 = vmatprep.subr.bf16.mxu0 0
    %148 = vmatpush1.bf16.msra.mxu0 0
    %149 = vmatprep.subr.bf16.mxu0 0
    %150 = vmatpush1.bf16.msra.mxu0 0
    %151 = vmatprep.subr.bf16.mxu0 0
    %152 = vmatpush1.bf16.msra.mxu0 0
    %153 = vmatprep.subr.bf16.mxu0 0
    %154 = vmatpush1.bf16.msra.mxu0 0
    %155 = vmatprep.subr.bf16.mxu0 0
    %156 = vmatpush1.bf16.msra.mxu0 0
    %157 = vmatprep.mubr.bf16.mxu0 0
    %158 = vmatmul.mubr.bf16.gmra.mrb[0].mxu0 %v120
    %v159 = vpop.f32.mrb[0].mxu0
    %v160 = vadd.f32 0.0, %v159
    %v161 = vpop.f32.mrb[0].mxu0
    %v162 = vadd.f32 0.0, %v161
    %v163 = vpop.f32.mrb[0].mxu0
    %v164 = vadd.f32 0.0, %v163
    %v165 = vpop.f32.mrb[0].mxu0
    %v166 = vadd.f32 0.0, %v165
    %167 = vmatprep.mubr.bf16.mxu0 0
    %168 = vmatmul.mubr.bf16.gmra.mrb[0].mxu0 %v123
    %v169 = vpop.f32.mrb[0].mxu0
    %v170 = vadd.f32 0.0, %v169
    %v171 = vpop.f32.mrb[0].mxu0
    %v172 = vadd.f32 0.0, %v171
    %v173 = vpop.f32.mrb[0].mxu0
    %v174 = vadd.f32 0.0, %v173
    %v175 = vpop.f32.mrb[0].mxu0
    %v176 = vadd.f32 0.0, %v175
    %177 = vdwg.mxu0
    %178 = vmatprep.subr.bf16.mxu0 %v105
    %179 = vmatpush1.bf16.msra.mxu0 %v104
    %180 = vmatprep.subr.bf16.mxu0 0
    %181 = vmatpush1.bf16.msra.mxu0 0
    %182 = vmatprep.subr.bf16.mxu0 0
    %183 = vmatpush1.bf16.msra.mxu0 0
    %184 = vmatprep.subr.bf16.mxu0 0
    %185 = vmatpush1.bf16.msra.mxu0 0
    %186 = vmatprep.subr.bf16.mxu0 0
    %187 = vmatpush1.bf16.msra.mxu0 0
    %188 = vmatprep.subr.bf16.mxu0 0
    %189 = vmatpush1.bf16.msra.mxu0 0
    %190 = vmatprep.subr.bf16.mxu0 0
    %191 = vmatpush1.bf16.msra.mxu0 0
    %192 = vmatprep.subr.bf16.mxu0 0
    %193 = vmatpush1.bf16.msra.mxu0 0
    %194 = vmatprep.subr.bf16.mxu0 0
    %195 = vmatpush1.bf16.msra.mxu0 0
    %196 = vmatprep.subr.bf16.mxu0 0
    %197 = vmatpush1.bf16.msra.mxu0 0
    %198 = vmatprep.subr.bf16.mxu0 0
    %199 = vmatpush1.bf16.msra.mxu0 0
    %200 = vmatprep.subr.bf16.mxu0 0
    %201 = vmatpush1.bf16.msra.mxu0 0
    %202 = vmatprep.subr.bf16.mxu0 0
    %203 = vmatpush1.bf16.msra.mxu0 0
    %204 = vmatprep.subr.bf16.mxu0 0
    %205 = vmatpush1.bf16.msra.mxu0 0
    %206 = vmatprep.subr.bf16.mxu0 0
    %207 = vmatpush1.bf16.msra.mxu0 0
    %208 = vmatprep.subr.bf16.mxu0 0
    %209 = vmatpush1.bf16.msra.mxu0 0
    %210 = vmatprep.mubr.bf16.mxu0 0
    %211 = vmatmul.mubr.bf16.gmra.mrb[0].mxu0 %v120
    %v212 = vpop.f32.mrb[0].mxu0
    %v213 = vadd.f32 0.0, %v212
    %v214 = vpop.f32.mrb[0].mxu0
    %v215 = vadd.f32 0.0, %v214
    %v216 = vpop.f32.mrb[0].mxu0
    %v217 = vadd.f32 0.0, %v216
    %v218 = vpop.f32.mrb[0].mxu0
    %v219 = vadd.f32 0.0, %v218
    %220 = vmatprep.mubr.bf16.mxu0 0
    %221 = vmatmul.mubr.bf16.gmra.mrb[0].mxu0 %v123
    %v222 = vpop.f32.mrb[0].mxu0
    %v223 = vadd.f32 0.0, %v222
    %v224 = vpop.f32.mrb[0].mxu0
    %v225 = vadd.f32 0.0, %v224
    %v226 = vpop.f32.mrb[0].mxu0
    %v227 = vadd.f32 0.0, %v226
    %v228 = vpop.f32.mrb[0].mxu0
    %v229 = vadd.f32 0.0, %v228
    %230 = vdwg.mxu0
    %231 = vmatprep.subr.bf16.mxu0 %v107
    %232 = vmatpush1.bf16.msra.mxu0 %v106
    %233 = vmatprep.subr.bf16.mxu0 0
    %234 = vmatpush1.bf16.msra.mxu0 0
    %235 = vmatprep.subr.bf16.mxu0 0
    %236 = vmatpush1.bf16.msra.mxu0 0
    %237 = vmatprep.subr.bf16.mxu0 0
    %238 = vmatpush1.bf16.msra.mxu0 0
    %239 = vmatprep.subr.bf16.mxu0 0
    %240 = vmatpush1.bf16.msra.mxu0 0
    %241 = vmatprep.subr.bf16.mxu0 0
    %242 = vmatpush1.bf16.msra.mxu0 0
    %243 = vmatprep.subr.bf16.mxu0 0
    %244 = vmatpush1.bf16.msra.mxu0 0
    %245 = vmatprep.subr.bf16.mxu0 0
    %246 = vmatpush1.bf16.msra.mxu0 0
    %247 = vmatprep.subr.bf16.mxu0 0
    %248 = vmatpush1.bf16.msra.mxu0 0
    %249 = vmatprep.subr.bf16.mxu0 0
    %250 = vmatpush1.bf16.msra.mxu0 0
    %251 = vmatprep.subr.bf16.mxu0 0
    %252 = vmatpush1.bf16.msra.mxu0 0
    %253 = vmatprep.subr.bf16.mxu0 0
    %254 = vmatpush1.bf16.msra.mxu0 0
    %255 = vmatprep.subr.bf16.mxu0 0
    %256 = vmatpush1.bf16.msra.mxu0 0
    %257 = vmatprep.subr.bf16.mxu0 0
    %258 = vmatpush1.bf16.msra.mxu0 0
    %259 = vmatprep.subr.bf16.mxu0 0
    %260 = vmatpush1.bf16.msra.mxu0 0
    %261 = vmatprep.subr.bf16.mxu0 0
    %262 = vmatpush1.bf16.msra.mxu0 0
    %263 = vmatprep.mubr.bf16.mxu0 0
    %264 = vmatmul.mubr.bf16.gmra.mrb[0].mxu0 %v120
    %v265 = vpop.f32.mrb[0].mxu0
    %v266 = vadd.f32 0.0, %v265
    %v267 = vpop.f32.mrb[0].mxu0
    %v268 = vadd.f32 0.0, %v267
    %v269 = vpop.f32.mrb[0].mxu0
    %v270 = vadd.f32 0.0, %v269
    %v271 = vpop.f32.mrb[0].mxu0
    %v272 = vadd.f32 0.0, %v271
    %273 = vmatprep.mubr.bf16.mxu0 0
    %274 = vmatmul.mubr.bf16.gmra.mrb[0].mxu0 %v123
    %v275 = vpop.f32.mrb[0].mxu0
    %v276 = vadd.f32 0.0, %v275
    %v277 = vpop.f32.mrb[0].mxu0
    %v278 = vadd.f32 0.0, %v277
    %v279 = vpop.f32.mrb[0].mxu0
    %v280 = vadd.f32 0.0, %v279
    %v281 = vpop.f32.mrb[0].mxu0
    %v282 = vadd.f32 0.0, %v281
    %283 = vdwg.mxu0
    %284 = vmatprep.subr.bf16.mxu0 %v109
    %285 = vmatpush1.bf16.msra.mxu0 %v108
    %286 = vmatprep.subr.bf16.mxu0 0
    %287 = vmatpush1.bf16.msra.mxu0 0
    %288 = vmatprep.subr.bf16.mxu0 0
    %289 = vmatpush1.bf16.msra.mxu0 0
    %290 = vmatprep.subr.bf16.mxu0 0
    %291 = vmatpush1.bf16.msra.mxu0 0
    %292 = vmatprep.subr.bf16.mxu0 0
    %293 = vmatpush1.bf16.msra.mxu0 0
    %294 = vmatprep.subr.bf16.mxu0 0
    %295 = vmatpush1.bf16.msra.mxu0 0
    %296 = vmatprep.subr.bf16.mxu0 0
    %297 = vmatpush1.bf16.msra.mxu0 0
    %298 = vmatprep.subr.bf16.mxu0 0
    %299 = vmatpush1.bf16.msra.mxu0 0
    %300 = vmatprep.subr.bf16.mxu0 0
    %301 = vmatpush1.bf16.msra.mxu0 0
    %302 = vmatprep.subr.bf16.mxu0 0
    %303 = vmatpush1.bf16.msra.mxu0 0
    %304 = vmatprep.subr.bf16.mxu0 0
    %305 = vmatpush1.bf16.msra.mxu0 0
    %306 = vmatprep.subr.bf16.mxu0 0
    %307 = vmatpush1.bf16.msra.mxu0 0
    %308 = vmatprep.subr.bf16.mxu0 0
    %309 = vmatpush1.bf16.msra.mxu0 0
    %310 = vmatprep.subr.bf16.mxu0 0
    %311 = vmatpush1.bf16.msra.mxu0 0
    %312 = vmatprep.subr.bf16.mxu0 0
    %313 = vmatpush1.bf16.msra.mxu0 0
    %314 = vmatprep.subr.bf16.mxu0 0
    %315 = vmatpush1.bf16.msra.mxu0 0
    %316 = vmatprep.mubr.bf16.mxu0 0
    %317 = vmatmul.mubr.bf16.gmra.mrb[0].mxu0 %v120
    %v318 = vpop.f32.mrb[0].mxu0
    %v319 = vadd.f32 0.0, %v318
    %v320 = vpop.f32.mrb[0].mxu0
    %v321 = vadd.f32 0.0, %v320
    %v322 = vpop.f32.mrb[0].mxu0
    %v323 = vadd.f32 0.0, %v322
    %v324 = vpop.f32.mrb[0].mxu0
    %v325 = vadd.f32 0.0, %v324
    %326 = vmatprep.mubr.bf16.mxu0 0
    %327 = vmatmul.mubr.bf16.gmra.mrb[0].mxu0 %v123
    %v328 = vpop.f32.mrb[0].mxu0
    %v329 = vadd.f32 0.0, %v328
    %v330 = vpop.f32.mrb[0].mxu0
    %v331 = vadd.f32 0.0, %v330
    %v332 = vpop.f32.mrb[0].mxu0
    %v333 = vadd.f32 0.0, %v332
    %v334 = vpop.f32.mrb[0].mxu0
    %v335 = vadd.f32 0.0, %v334
    %336 = vdwg.mxu0
    %v337 = vadd.f32 %v160, %v164
    %v338 = vadd.f32 %v337, %v170
    %v339 = vadd.f32 %v338, %v174
    %v340 = vrot.slane %v339, 4
    %v341 = vadd.f32 %v339, %v340
    %v342 = vrot.slane %v341, 2
    %v343 = vadd.f32 %v341, %v342
    %v344 = vrot.slane %v343, 1
    %v345 = vadd.f32 %v343, %v344
    %v346 = vadd.f32 %v162, %v166
    %v347 = vadd.f32 %v346, %v172
    %v348 = vadd.f32 %v347, %v176
    %v349 = vrot.slane %v348, 4
    %v350 = vadd.f32 %v348, %v349
    %v351 = vrot.slane %v350, 2
    %v352 = vadd.f32 %v350, %v351
    %v353 = vrot.slane %v352, 1
    %v354 = vadd.f32 %v352, %v353
    %v355 = vadd.f32 %v213, %v217
    %v356 = vadd.f32 %v355, %v223
    %v357 = vadd.f32 %v356, %v227
    %v358 = vrot.slane %v357, 4
    %v359 = vadd.f32 %v357, %v358
    %v360 = vrot.slane %v359, 2
    %v361 = vadd.f32 %v359, %v360
    %v362 = vrot.slane %v361, 1
    %v363 = vadd.f32 %v361, %v362
    %v364 = vadd.f32 %v215, %v219
    %v365 = vadd.f32 %v364, %v225
    %v366 = vadd.f32 %v365, %v229
    %v367 = vrot.slane %v366, 4
    %v368 = vadd.f32 %v366, %v367
    %v369 = vrot.slane %v368, 2
    %v370 = vadd.f32 %v368, %v369
    %v371 = vrot.slane %v370, 1
    %v372 = vadd.f32 %v370, %v371
    %v373 = vadd.f32 %v266, %v270
    %v374 = vadd.f32 %v373, %v276
    %v375 = vadd.f32 %v374, %v280
    %v376 = vrot.slane %v375, 4
    %v377 = vadd.f32 %v375, %v376
    %v378 = vrot.slane %v377, 2
    %v379 = vadd.f32 %v377, %v378
    %v380 = vrot.slane %v379, 1
    %v381 = vadd.f32 %v379, %v380
    %v382 = vadd.f32 %v268, %v272
    %v383 = vadd.f32 %v382, %v278
    %v384 = vadd.f32 %v383, %v282
    %v385 = vrot.slane %v384, 4
    %v386 = vadd.f32 %v384, %v385
    %v387 = vrot.slane %v386, 2
    %v388 = vadd.f32 %v386, %v387
    %v389 = vrot.slane %v388, 1
    %v390 = vadd.f32 %v388, %v389
    %v391 = vadd.f32 %v319, %v323
    %v392 = vadd.f32 %v391, %v329
    %v393 = vadd.f32 %v392, %v333
    %v394 = vrot.slane %v393, 4
    %v395 = vadd.f32 %v393, %v394
    %v396 = vrot.slane %v395, 2
    %v397 = vadd.f32 %v395, %v396
    %v398 = vrot.slane %v397, 1
    %v399 = vadd.f32 %v397, %v398
    %v400 = vadd.f32 %v321, %v325
    %v401 = vadd.f32 %v400, %v331
    %v402 = vadd.f32 %v401, %v335
    %v403 = vrot.slane %v402, 4
    %v404 = vadd.f32 %v402, %v403
    %v405 = vrot.slane %v404, 2
    %v406 = vadd.f32 %v404, %v405
    %v407 = vrot.slane %v406, 1
    %v408 = vadd.f32 %v406, %v407
    %v409 = vmul.f32 %v160, %v160
    %v410 = vmul.f32 %v162, %v162
    %v411 = vmul.f32 %v213, %v213
    %v412 = vmul.f32 %v215, %v215
    %v413 = vmul.f32 %v266, %v266
    %v414 = vmul.f32 %v268, %v268
    %v415 = vmul.f32 %v319, %v319
    %v416 = vmul.f32 %v321, %v321
    %v417 = vmul.f32 %v164, %v164
    %v418 = vmul.f32 %v166, %v166
    %v419 = vmul.f32 %v217, %v217
    %v420 = vmul.f32 %v219, %v219
    %v421 = vmul.f32 %v270, %v270
    %v422 = vmul.f32 %v272, %v272
    %v423 = vmul.f32 %v323, %v323
    %v424 = vmul.f32 %v325, %v325
    %v425 = vmul.f32 %v170, %v170
    %v426 = vmul.f32 %v172, %v172
    %v427 = vmul.f32 %v223, %v223
    %v428 = vmul.f32 %v225, %v225
    %v429 = vmul.f32 %v276, %v276
    %v430 = vmul.f32 %v278, %v278
    %v431 = vmul.f32 %v329, %v329
    %v432 = vmul.f32 %v331, %v331
    %v433 = vmul.f32 %v174, %v174
    %v434 = vmul.f32 %v176, %v176
    %v435 = vmul.f32 %v227, %v227
    %v436 = vmul.f32 %v229, %v229
    %v437 = vmul.f32 %v280, %v280
    %v438 = vmul.f32 %v282, %v282
    %v439 = vmul.f32 %v333, %v333
    %v440 = vmul.f32 %v335, %v335
    %v441 = vadd.f32 %v409, %v417
    %v442 = vadd.f32 %v441, %v425
    %v443 = vadd.f32 %v442, %v433
    %v444 = vrot.slane %v443, 4
    %v445 = vadd.f32 %v443, %v444
    %v446 = vrot.slane %v445, 2
    %v447 = vadd.f32 %v445, %v446
    %v448 = vrot.slane %v447, 1
    %v449 = vadd.f32 %v447, %v448
    %v450 = vadd.f32 %v410, %v418
    %v451 = vadd.f32 %v450, %v426
    %v452 = vadd.f32 %v451, %v434
    %v453 = vrot.slane %v452, 4
    %v454 = vadd.f32 %v452, %v453
    %v455 = vrot.slane %v454, 2
    %v456 = vadd.f32 %v454, %v455
    %v457 = vrot.slane %v456, 1
    %v458 = vadd.f32 %v456, %v457
    %v459 = vadd.f32 %v411, %v419
    %v460 = vadd.f32 %v459, %v427
    %v461 = vadd.f32 %v460, %v435
    %v462 = vrot.slane %v461, 4
    %v463 = vadd.f32 %v461, %v462
    %v464 = vrot.slane %v463, 2
    %v465 = vadd.f32 %v463, %v464
    %v466 = vrot.slane %v465, 1
    %v467 = vadd.f32 %v465, %v466
    %v468 = vadd.f32 %v412, %v420
    %v469 = vadd.f32 %v468, %v428
    %v470 = vadd.f32 %v469, %v436
    %v471 = vrot.slane %v470, 4
    %v472 = vadd.f32 %v470, %v471
    %v473 = vrot.slane %v472, 2
    %v474 = vadd.f32 %v472, %v473
    %v475 = vrot.slane %v474, 1
    %v476 = vadd.f32 %v474, %v475
    %v477 = vadd.f32 %v413, %v421
    %v478 = vadd.f32 %v477, %v429
    %v479 = vadd.f32 %v478, %v437
    %v480 = vrot.slane %v479, 4
    %v481 = vadd.f32 %v479, %v480
    %v482 = vrot.slane %v481, 2
    %v483 = vadd.f32 %v481, %v482
    %v484 = vrot.slane %v483, 1
    %v485 = vadd.f32 %v483, %v484
    %v486 = vadd.f32 %v414, %v422
    %v487 = vadd.f32 %v486, %v430
    %v488 = vadd.f32 %v487, %v438
    %v489 = vrot.slane %v488, 4
    %v490 = vadd.f32 %v488, %v489
    %v491 = vrot.slane %v490, 2
    %v492 = vadd.f32 %v490, %v491
    %v493 = vrot.slane %v492, 1
    %v494 = vadd.f32 %v492, %v493
    %v495 = vadd.f32 %v415, %v423
    %v496 = vadd.f32 %v495, %v431
    %v497 = vadd.f32 %v496, %v439
    %v498 = vrot.slane %v497, 4
    %v499 = vadd.f32 %v497, %v498
    %v500 = vrot.slane %v499, 2
    %v501 = vadd.f32 %v499, %v500
    %v502 = vrot.slane %v501, 1
    %v503 = vadd.f32 %v501, %v502
    %v504 = vadd.f32 %v416, %v424
    %v505 = vadd.f32 %v504, %v432
    %v506 = vadd.f32 %v505, %v440
    %v507 = vrot.slane %v506, 4
    %v508 = vadd.f32 %v506, %v507
    %v509 = vrot.slane %v508, 2
    %v510 = vadd.f32 %v508, %v509
    %v511 = vrot.slane %v510, 1
    %v512 = vadd.f32 %v510, %v511
    %v513 = vadd.f32 %v345, %v363
    %v514 = vadd.f32 %v354, %v372
    %v515 = vadd.f32 %v449, %v467
    %v516 = vadd.f32 %v458, %v476
    %v517 = vadd.f32 %v513, %v381
    %v518 = vadd.f32 %v514, %v390
    %v519 = vadd.f32 %v515, %v485
    %v520 = vadd.f32 %v516, %v494
    %v521 = vadd.f32 %v517, %v399
    %v522 = vadd.f32 %v518, %v408
    %v523 = vadd.f32 %v519, %v503
    %v524 = vadd.f32 %v520, %v512
    %v525 = vmul.f32 %v521, 0.0078125
    %v526 = vmul.f32 %v522, 0.0078125
    %v527 = vmul.f32 %v523, 0.0078125
    %v528 = vmul.f32 %v524, 0.0078125
    %v529 = vmul.f32 %v525, %v525
    %v530 = vmul.f32 %v526, %v526
    %v531 = vsub.f32 %v527, %v529
    %v532 = vsub.f32 %v528, %v530
    %v533 = vmax.f32 %v531, 0.0
    %v534 = vmax.f32 %v532, 0.0
    %v535 = vadd.f32 %v533, 1e-05
    %v536 = vadd.f32 %v534, 1e-05
    %v537 = vrsqrt.pop %v535
    %v538 = vrsqrt.pop %v536
    %v539 = vld [vmem:[%s2] sm:$0x3]
    %v541 = vlaneseq
    %v542 = vshrl.u32 %v541, 7
    %v543 = vsub.s32 0, %v542
    %v544 = vrot.slane %v539, %v543
    %v545 = vlaneseq
    %v546 = vshrl.u32 %v545, 7
    %v547 = vsub.s32 1, %v546
    %v548 = vrot.slane %v539, %v547
    %v551 = vmul.f32 %v537, %v544
    %v552 = vmul.f32 %v538, %v548
    %v553 = vld [vmem:[%s3] sm:$0x3]
    %v554 = vmul.f32 %v525, %v551
    %v555 = vmul.f32 %v526, %v552
    %v558 = vcombine.low %v554, %v555
    %v560 = vunpack.c.l.s4 1966171168
    %v561 = vunpack.c.0.s8 %v560
    %v562 = vlaneseq
    %v563 = vshrl.u32 %v562, 7
    %v564 = vsub.s32 %v561, %v563
    %v565 = vrot.slane %v558, %v564
    %v567 = vunpack.c.l.s4 1966171168
    %v568 = vunpack.c.0.s8 %v567
    %v569 = vlaneseq
    %v570 = vshrl.u32 %v569, 7
    %v571 = vsub.s32 %v568, %v570
    %v572 = vrot.slane %v565, %v571
    %v574 = vsub.f32 %v553, %v572
    %v576 = vlaneseq
    %v577 = vshrl.u32 %v576, 7
    %v578 = vsub.s32 0, %v577
    %v579 = vrot.slane %v574, %v578
    %v580 = vlaneseq
    %v581 = vshrl.u32 %v580, 7
    %v582 = vsub.s32 1, %v581
    %v583 = vrot.slane %v574, %v582
    %v586 = vlaneseq
    %v587 = vshrl.u32 %v586, 7
    %v588 = vsub.s32 0, %v587
    %v589 = vrot.slane %v551, %v588
    %v590 = vlaneseq
    %v591 = vshrl.u32 %v590, 7
    %v592 = vsub.s32 0, %v591
    %v593 = vrot.slane %v552, %v592
    %v594 = vmul.f32 %v160, %v589
    %v595 = vmul.f32 %v162, %v593
    %v596 = vmul.f32 %v213, %v589
    %v597 = vmul.f32 %v215, %v593
    %v598 = vmul.f32 %v266, %v589
    %v599 = vmul.f32 %v268, %v593
    %v600 = vmul.f32 %v319, %v589
    %v601 = vmul.f32 %v321, %v593
    %v602 = vmul.f32 %v164, %v589
    %v603 = vmul.f32 %v166, %v593
    %v604 = vmul.f32 %v217, %v589
    %v605 = vmul.f32 %v219, %v593
    %v606 = vmul.f32 %v270, %v589
    %v607 = vmul.f32 %v272, %v593
    %v608 = vmul.f32 %v323, %v589
    %v609 = vmul.f32 %v325, %v593
    %v610 = vmul.f32 %v170, %v589
    %v611 = vmul.f32 %v172, %v593
    %v612 = vmul.f32 %v223, %v589
    %v613 = vmul.f32 %v225, %v593
    %v614 = vmul.f32 %v276, %v589
    %v615 = vmul.f32 %v278, %v593
    %v616 = vmul.f32 %v329, %v589
    %v617 = vmul.f32 %v331, %v593
    %v618 = vmul.f32 %v174, %v589
    %v619 = vmul.f32 %v176, %v593
    %v620 = vmul.f32 %v227, %v589
    %v621 = vmul.f32 %v229, %v593
    %v622 = vmul.f32 %v280, %v589
    %v623 = vmul.f32 %v282, %v593
    %v624 = vmul.f32 %v333, %v589
    %v625 = vmul.f32 %v335, %v593
    %v626 = vlaneseq
    %v627 = vshrl.u32 %v626, 7
    %v628 = vsub.s32 0, %v627
    %v629 = vrot.slane %v579, %v628
    %v630 = vlaneseq
    %v631 = vshrl.u32 %v630, 7
    %v632 = vsub.s32 0, %v631
    %v633 = vrot.slane %v583, %v632
    %v634 = vadd.f32 %v594, %v629
    %v635 = vadd.f32 %v595, %v633
    %v636 = vadd.f32 %v596, %v629
    %v637 = vadd.f32 %v597, %v633
    %v638 = vadd.f32 %v598, %v629
    %v639 = vadd.f32 %v599, %v633
    %v640 = vadd.f32 %v600, %v629
    %v641 = vadd.f32 %v601, %v633
    %v642 = vadd.f32 %v602, %v629
    %v643 = vadd.f32 %v603, %v633
    %v644 = vadd.f32 %v604, %v629
    %v645 = vadd.f32 %v605, %v633
    %v646 = vadd.f32 %v606, %v629
    %v647 = vadd.f32 %v607, %v633
    %v648 = vadd.f32 %v608, %v629
    %v649 = vadd.f32 %v609, %v633
    %v650 = vadd.f32 %v610, %v629
    %v651 = vadd.f32 %v611, %v633
    %v652 = vadd.f32 %v612, %v629
    %v653 = vadd.f32 %v613, %v633
    %v654 = vadd.f32 %v614, %v629
    %v655 = vadd.f32 %v615, %v633
    %v656 = vadd.f32 %v616, %v629
    %v657 = vadd.f32 %v617, %v633
    %v658 = vadd.f32 %v618, %v629
    %v659 = vadd.f32 %v619, %v633
    %v660 = vadd.f32 %v620, %v629
    %v661 = vadd.f32 %v621, %v633
    %v662 = vadd.f32 %v622, %v629
    %v663 = vadd.f32 %v623, %v633
    %v664 = vadd.f32 %v624, %v629
    %v665 = vadd.f32 %v625, %v633
    %v666 = vmul.f32 %v634, 0.5
    %v667 = vmul.f32 %v635, 0.5
    %v668 = vmul.f32 %v636, 0.5
    %v669 = vmul.f32 %v637, 0.5
    %v670 = vmul.f32 %v638, 0.5
    %v671 = vmul.f32 %v639, 0.5
    %v672 = vmul.f32 %v640, 0.5
    %v673 = vmul.f32 %v641, 0.5
    %v674 = vmul.f32 %v642, 0.5
    %v675 = vmul.f32 %v643, 0.5
    %v676 = vmul.f32 %v644, 0.5
    %v677 = vmul.f32 %v645, 0.5
    %v678 = vmul.f32 %v646, 0.5
    %v679 = vmul.f32 %v647, 0.5
    %v680 = vmul.f32 %v648, 0.5
    %v681 = vmul.f32 %v649, 0.5
    %v682 = vmul.f32 %v650, 0.5
    %v683 = vmul.f32 %v651, 0.5
    %v684 = vmul.f32 %v652, 0.5
    %v685 = vmul.f32 %v653, 0.5
    %v686 = vmul.f32 %v654, 0.5
    %v687 = vmul.f32 %v655, 0.5
    %v688 = vmul.f32 %v656, 0.5
    %v689 = vmul.f32 %v657, 0.5
    %v690 = vmul.f32 %v658, 0.5
    %v691 = vmul.f32 %v659, 0.5
    %v692 = vmul.f32 %v660, 0.5
    %v693 = vmul.f32 %v661, 0.5
    %v694 = vmul.f32 %v662, 0.5
    %v695 = vmul.f32 %v663, 0.5
    %v696 = vmul.f32 %v664, 0.5
    %v697 = vmul.f32 %v665, 0.5
    %v698 = vmul.f32 %v634, 0.70710677
    %v699 = vmul.f32 %v635, 0.70710677
    %v700 = vmul.f32 %v636, 0.70710677
    %v701 = vmul.f32 %v637, 0.70710677
    %v702 = vmul.f32 %v638, 0.70710677
    %v703 = vmul.f32 %v639, 0.70710677
    %v704 = vmul.f32 %v640, 0.70710677
    %v705 = vmul.f32 %v641, 0.70710677
    %v706 = vmul.f32 %v642, 0.70710677
    %v707 = vmul.f32 %v643, 0.70710677
    %v708 = vmul.f32 %v644, 0.70710677
    %v709 = vmul.f32 %v645, 0.70710677
    %v710 = vmul.f32 %v646, 0.70710677
    %v711 = vmul.f32 %v647, 0.70710677
    %v712 = vmul.f32 %v648, 0.70710677
    %v713 = vmul.f32 %v649, 0.70710677
    %v714 = vmul.f32 %v650, 0.70710677
    %v715 = vmul.f32 %v651, 0.70710677
    %v716 = vmul.f32 %v652, 0.70710677
    %v717 = vmul.f32 %v653, 0.70710677
    %v718 = vmul.f32 %v654, 0.70710677
    %v719 = vmul.f32 %v655, 0.70710677
    %v720 = vmul.f32 %v656, 0.70710677
    %v721 = vmul.f32 %v657, 0.70710677
    %v722 = vmul.f32 %v658, 0.70710677
    %v723 = vmul.f32 %v659, 0.70710677
    %v724 = vmul.f32 %v660, 0.70710677
    %v725 = vmul.f32 %v661, 0.70710677
    %v726 = vmul.f32 %v662, 0.70710677
    %v727 = vmul.f32 %v663, 0.70710677
    %v728 = vmul.f32 %v664, 0.70710677
    %v729 = vmul.f32 %v665, 0.70710677
    %v730 = verf.f32.pop %v698
    %v731 = verf.f32.pop %v699
    %v732 = verf.f32.pop %v700
    %v733 = verf.f32.pop %v701
    %v734 = verf.f32.pop %v702
    %v735 = verf.f32.pop %v703
    %v736 = verf.f32.pop %v704
    %v737 = verf.f32.pop %v705
    %v738 = verf.f32.pop %v706
    %v739 = verf.f32.pop %v707
    %v740 = verf.f32.pop %v708
    %v741 = verf.f32.pop %v709
    %v742 = verf.f32.pop %v710
    %v743 = verf.f32.pop %v711
    %v744 = verf.f32.pop %v712
    %v745 = verf.f32.pop %v713
    %v746 = verf.f32.pop %v714
    %v747 = verf.f32.pop %v715
    %v748 = verf.f32.pop %v716
    %v749 = verf.f32.pop %v717
    %v750 = verf.f32.pop %v718
    %v751 = verf.f32.pop %v719
    %v752 = verf.f32.pop %v720
    %v753 = verf.f32.pop %v721
    %v754 = verf.f32.pop %v722
    %v755 = verf.f32.pop %v723
    %v756 = verf.f32.pop %v724
    %v757 = verf.f32.pop %v725
    %v758 = verf.f32.pop %v726
    %v759 = verf.f32.pop %v727
    %v760 = verf.f32.pop %v728
    %v761 = verf.f32.pop %v729
    %v762 = vadd.f32 %v730, 1.0
    %v763 = vadd.f32 %v731, 1.0
    %v764 = vadd.f32 %v732, 1.0
    %v765 = vadd.f32 %v733, 1.0
    %v766 = vadd.f32 %v734, 1.0
    %v767 = vadd.f32 %v735, 1.0
    %v768 = vadd.f32 %v736, 1.0
    %v769 = vadd.f32 %v737, 1.0
    %v770 = vadd.f32 %v738, 1.0
    %v771 = vadd.f32 %v739, 1.0
    %v772 = vadd.f32 %v740, 1.0
    %v773 = vadd.f32 %v741, 1.0
    %v774 = vadd.f32 %v742, 1.0
    %v775 = vadd.f32 %v743, 1.0
    %v776 = vadd.f32 %v744, 1.0
    %v777 = vadd.f32 %v745, 1.0
    %v778 = vadd.f32 %v746, 1.0
    %v779 = vadd.f32 %v747, 1.0
    %v780 = vadd.f32 %v748, 1.0
    %v781 = vadd.f32 %v749, 1.0
    %v782 = vadd.f32 %v750, 1.0
    %v783 = vadd.f32 %v751, 1.0
    %v784 = vadd.f32 %v752, 1.0
    %v785 = vadd.f32 %v753, 1.0
    %v786 = vadd.f32 %v754, 1.0
    %v787 = vadd.f32 %v755, 1.0
    %v788 = vadd.f32 %v756, 1.0
    %v789 = vadd.f32 %v757, 1.0
    %v790 = vadd.f32 %v758, 1.0
    %v791 = vadd.f32 %v759, 1.0
    %v792 = vadd.f32 %v760, 1.0
    %v793 = vadd.f32 %v761, 1.0
    %v794 = vmul.f32 %v666, %v762
    %v795 = vmul.f32 %v667, %v763
    %v796 = vmul.f32 %v668, %v764
    %v797 = vmul.f32 %v669, %v765
    %v798 = vmul.f32 %v670, %v766
    %v799 = vmul.f32 %v671, %v767
    %v800 = vmul.f32 %v672, %v768
    %v801 = vmul.f32 %v673, %v769
    %v802 = vmul.f32 %v674, %v770
    %v803 = vmul.f32 %v675, %v771
    %v804 = vmul.f32 %v676, %v772
    %v805 = vmul.f32 %v677, %v773
    %v806 = vmul.f32 %v678, %v774
    %v807 = vmul.f32 %v679, %v775
    %v808 = vmul.f32 %v680, %v776
    %v809 = vmul.f32 %v681, %v777
    %v810 = vmul.f32 %v682, %v778
    %v811 = vmul.f32 %v683, %v779
    %v812 = vmul.f32 %v684, %v780
    %v813 = vmul.f32 %v685, %v781
    %v814 = vmul.f32 %v686, %v782
    %v815 = vmul.f32 %v687, %v783
    %v816 = vmul.f32 %v688, %v784
    %v817 = vmul.f32 %v689, %v785
    %v818 = vmul.f32 %v690, %v786
    %v819 = vmul.f32 %v691, %v787
    %v820 = vmul.f32 %v692, %v788
    %v821 = vmul.f32 %v693, %v789
    %v822 = vmul.f32 %v694, %v790
    %v823 = vmul.f32 %v695, %v791
    %v824 = vmul.f32 %v696, %v792
    %v825 = vmul.f32 %v697, %v793
    %v826 = vpack.c.bf16 %v802, %v794
    %v827 = vpack.c.bf16 %v803, %v795
    %v828 = vpack.c.bf16 %v804, %v796
    %v829 = vpack.c.bf16 %v805, %v797
    %v830 = vpack.c.bf16 %v806, %v798
    %v831 = vpack.c.bf16 %v807, %v799
    %v832 = vpack.c.bf16 %v808, %v800
    %v833 = vpack.c.bf16 %v809, %v801
    %v834 = vpack.c.bf16 %v818, %v810
    %v835 = vpack.c.bf16 %v819, %v811
    %v836 = vpack.c.bf16 %v820, %v812
    %v837 = vpack.c.bf16 %v821, %v813
    %v838 = vpack.c.bf16 %v822, %v814
    %v839 = vpack.c.bf16 %v823, %v815
    %v840 = vpack.c.bf16 %v824, %v816
    %v841 = vpack.c.bf16 %v825, %v817
    %v842 = vld [vmem:[#allocation5] sm:$0xf]
    %v843 = vld [vmem:[#allocation5 + $0x4] sm:$0xf]
    %v844 = vld [vmem:[#allocation5 + $0x8] sm:$0xf]
    %v845 = vld [vmem:[#allocation5 + $0xc] sm:$0xf]
    %v846 = vld [vmem:[#allocation5 + $0x10] sm:$0xf]
    %v847 = vld [vmem:[#allocation5 + $0x14] sm:$0xf]
    %v848 = vld [vmem:[#allocation5 + $0x18] sm:$0xf]
    %v849 = vld [vmem:[#allocation5 + $0x1c] sm:$0xf]
    %v850 = vld [vmem:[#allocation5 + $0x20] sm:$0xf]
    %v851 = vld [vmem:[#allocation5 + $0x24] sm:$0xf]
    %v852 = vld [vmem:[#allocation5 + $0x28] sm:$0xf]
    %v853 = vld [vmem:[#allocation5 + $0x2c] sm:$0xf]
    %v854 = vld [vmem:[#allocation5 + $0x30] sm:$0xf]
    %v855 = vld [vmem:[#allocation5 + $0x34] sm:$0xf]
    %v856 = vld [vmem:[#allocation5 + $0x38] sm:$0xf]
    %v857 = vld [vmem:[#allocation5 + $0x3c] sm:$0xf]
    %v858 = vld [vmem:[#allocation5 + $0x40] sm:$0xf]
    %v859 = vld [vmem:[#allocation5 + $0x44] sm:$0xf]
    %v860 = vld [vmem:[#allocation5 + $0x48] sm:$0xf]
    %v861 = vld [vmem:[#allocation5 + $0x4c] sm:$0xf]
    %v862 = vld [vmem:[#allocation5 + $0x50] sm:$0xf]
    %v863 = vld [vmem:[#allocation5 + $0x54] sm:$0xf]
    %v864 = vld [vmem:[#allocation5 + $0x58] sm:$0xf]
    %v865 = vld [vmem:[#allocation5 + $0x5c] sm:$0xf]
    %v866 = vld [vmem:[#allocation5 + $0x60] sm:$0xf]
    %v867 = vld [vmem:[#allocation5 + $0x64] sm:$0xf]
    %v868 = vld [vmem:[#allocation5 + $0x68] sm:$0xf]
    %v869 = vld [vmem:[#allocation5 + $0x6c] sm:$0xf]
    %v870 = vld [vmem:[#allocation5 + $0x70] sm:$0xf]
    %v871 = vld [vmem:[#allocation5 + $0x74] sm:$0xf]
    %v872 = vld [vmem:[#allocation5 + $0x78] sm:$0xf]
    %v873 = vld [vmem:[#allocation5 + $0x7c] sm:$0xf]
    %v874 = vld [vmem:[#allocation5 + $0x80] sm:$0xf]
    %v875 = vld [vmem:[#allocation5 + $0x84] sm:$0xf]
    %v876 = vld [vmem:[#allocation5 + $0x88] sm:$0xf]
    %v877 = vld [vmem:[#allocation5 + $0x8c] sm:$0xf]
    %v878 = vld [vmem:[#allocation5 + $0x90] sm:$0xf]
    %v879 = vld [vmem:[#allocation5 + $0x94] sm:$0xf]
    %v880 = vld [vmem:[#allocation5 + $0x98] sm:$0xf]
    %v881 = vld [vmem:[#allocation5 + $0x9c] sm:$0xf]
    %v882 = vld [vmem:[#allocation5 + $0xa0] sm:$0xf]
    %v883 = vld [vmem:[#allocation5 + $0xa4] sm:$0xf]
    %v884 = vld [vmem:[#allocation5 + $0xa8] sm:$0xf]
    %v885 = vld [vmem:[#allocation5 + $0xac] sm:$0xf]
    %v886 = vld [vmem:[#allocation5 + $0xb0] sm:$0xf]
    %v887 = vld [vmem:[#allocation5 + $0xb4] sm:$0xf]
    %v888 = vld [vmem:[#allocation5 + $0xb8] sm:$0xf]
    %v889 = vld [vmem:[#allocation5 + $0xbc] sm:$0xf]
    %v890 = vld [vmem:[#allocation5 + $0xc0] sm:$0xf]
    %v891 = vld [vmem:[#allocation5 + $0xc4] sm:$0xf]
    %v892 = vld [vmem:[#allocation5 + $0xc8] sm:$0xf]
    %v893 = vld [vmem:[#allocation5 + $0xcc] sm:$0xf]
    %v894 = vld [vmem:[#allocation5 + $0xd0] sm:$0xf]
    %v895 = vld [vmem:[#allocation5 + $0xd4] sm:$0xf]
    %v896 = vld [vmem:[#allocation5 + $0xd8] sm:$0xf]
    %v897 = vld [vmem:[#allocation5 + $0xdc] sm:$0xf]
    %v898 = vld [vmem:[#allocation5 + $0xe0] sm:$0xf]
    %v899 = vld [vmem:[#allocation5 + $0xe4] sm:$0xf]
    %v900 = vld [vmem:[#allocation5 + $0xe8] sm:$0xf]
    %v901 = vld [vmem:[#allocation5 + $0xec] sm:$0xf]
    %v902 = vld [vmem:[#allocation5 + $0xf0] sm:$0xf]
    %v903 = vld [vmem:[#allocation5 + $0xf4] sm:$0xf]
    %v904 = vld [vmem:[#allocation5 + $0xf8] sm:$0xf]
    %v905 = vld [vmem:[#allocation5 + $0xfc] sm:$0xf]
    %v906 = vld [vmem:[#allocation5 + $0x100] sm:$0xf]
    %v907 = vld [vmem:[#allocation5 + $0x104] sm:$0xf]
    %v908 = vld [vmem:[#allocation5 + $0x108] sm:$0xf]
    %v909 = vld [vmem:[#allocation5 + $0x10c] sm:$0xf]
    %v910 = vld [vmem:[#allocation5 + $0x110] sm:$0xf]
    %v911 = vld [vmem:[#allocation5 + $0x114] sm:$0xf]
    %v912 = vld [vmem:[#allocation5 + $0x118] sm:$0xf]
    %v913 = vld [vmem:[#allocation5 + $0x11c] sm:$0xf]
    %v914 = vld [vmem:[#allocation5 + $0x120] sm:$0xf]
    %v915 = vld [vmem:[#allocation5 + $0x124] sm:$0xf]
    %v916 = vld [vmem:[#allocation5 + $0x128] sm:$0xf]
    %v917 = vld [vmem:[#allocation5 + $0x12c] sm:$0xf]
    %v918 = vld [vmem:[#allocation5 + $0x130] sm:$0xf]
    %v919 = vld [vmem:[#allocation5 + $0x134] sm:$0xf]
    %v920 = vld [vmem:[#allocation5 + $0x138] sm:$0xf]
    %v921 = vld [vmem:[#allocation5 + $0x13c] sm:$0xf]
    %v922 = vld [vmem:[#allocation5 + $0x140] sm:$0xf]
    %v923 = vld [vmem:[#allocation5 + $0x144] sm:$0xf]
    %v924 = vld [vmem:[#allocation5 + $0x148] sm:$0xf]
    %v925 = vld [vmem:[#allocation5 + $0x14c] sm:$0xf]
    %v926 = vld [vmem:[#allocation5 + $0x150] sm:$0xf]
    %v927 = vld [vmem:[#allocation5 + $0x154] sm:$0xf]
    %v928 = vld [vmem:[#allocation5 + $0x158] sm:$0xf]
    %v929 = vld [vmem:[#allocation5 + $0x15c] sm:$0xf]
    %v930 = vld [vmem:[#allocation5 + $0x160] sm:$0xf]
    %v931 = vld [vmem:[#allocation5 + $0x164] sm:$0xf]
    %v932 = vld [vmem:[#allocation5 + $0x168] sm:$0xf]
    %v933 = vld [vmem:[#allocation5 + $0x16c] sm:$0xf]
    %v934 = vld [vmem:[#allocation5 + $0x170] sm:$0xf]
    %v935 = vld [vmem:[#allocation5 + $0x174] sm:$0xf]
    %v936 = vld [vmem:[#allocation5 + $0x178] sm:$0xf]
    %v937 = vld [vmem:[#allocation5 + $0x17c] sm:$0xf]
    %v938 = vld [vmem:[#allocation5 + $0x180] sm:$0xf]
    %v939 = vld [vmem:[#allocation5 + $0x184] sm:$0xf]
    %v940 = vld [vmem:[#allocation5 + $0x188] sm:$0xf]
    %v941 = vld [vmem:[#allocation5 + $0x18c] sm:$0xf]
    %v942 = vld [vmem:[#allocation5 + $0x190] sm:$0xf]
    %v943 = vld [vmem:[#allocation5 + $0x194] sm:$0xf]
    %v944 = vld [vmem:[#allocation5 + $0x198] sm:$0xf]
    %v945 = vld [vmem:[#allocation5 + $0x19c] sm:$0xf]
    %v946 = vld [vmem:[#allocation5 + $0x1a0] sm:$0xf]
    %v947 = vld [vmem:[#allocation5 + $0x1a4] sm:$0xf]
    %v948 = vld [vmem:[#allocation5 + $0x1a8] sm:$0xf]
    %v949 = vld [vmem:[#allocation5 + $0x1ac] sm:$0xf]
    %v950 = vld [vmem:[#allocation5 + $0x1b0] sm:$0xf]
    %v951 = vld [vmem:[#allocation5 + $0x1b4] sm:$0xf]
    %v952 = vld [vmem:[#allocation5 + $0x1b8] sm:$0xf]
    %v953 = vld [vmem:[#allocation5 + $0x1bc] sm:$0xf]
    %v954 = vld [vmem:[#allocation5 + $0x1c0] sm:$0xf]
    %v955 = vld [vmem:[#allocation5 + $0x1c4] sm:$0xf]
    %v956 = vld [vmem:[#allocation5 + $0x1c8] sm:$0xf]
    %v957 = vld [vmem:[#allocation5 + $0x1cc] sm:$0xf]
    %v958 = vld [vmem:[#allocation5 + $0x1d0] sm:$0xf]
    %v959 = vld [vmem:[#allocation5 + $0x1d4] sm:$0xf]
    %v960 = vld [vmem:[#allocation5 + $0x1d8] sm:$0xf]
    %v961 = vld [vmem:[#allocation5 + $0x1dc] sm:$0xf]
    %v962 = vld [vmem:[#allocation5 + $0x1e0] sm:$0xf]
    %v963 = vld [vmem:[#allocation5 + $0x1e4] sm:$0xf]
    %v964 = vld [vmem:[#allocation5 + $0x1e8] sm:$0xf]
    %v965 = vld [vmem:[#allocation5 + $0x1ec] sm:$0xf]
    %v966 = vld [vmem:[#allocation5 + $0x1f0] sm:$0xf]
    %v967 = vld [vmem:[#allocation5 + $0x1f4] sm:$0xf]
    %v968 = vld [vmem:[#allocation5 + $0x1f8] sm:$0xf]
    %v969 = vld [vmem:[#allocation5 + $0x1fc] sm:$0xf]
    %v1098 = vunpack.c.l.b16 %v842
    %v1099 = vunpack.c.l.b16 %v843
    %v1100 = vunpack.c.l.b16 %v844
    %v1101 = vunpack.c.l.b16 %v845
    %v1102 = vunpack.c.l.b16 %v846
    %v1103 = vunpack.c.l.b16 %v847
    %v1104 = vunpack.c.l.b16 %v848
    %v1105 = vunpack.c.l.b16 %v849
    %v1106 = vunpack.c.l.b16 %v850
    %v1107 = vunpack.c.l.b16 %v851
    %v1108 = vunpack.c.l.b16 %v852
    %v1109 = vunpack.c.l.b16 %v853
    %v1110 = vunpack.c.l.b16 %v854
    %v1111 = vunpack.c.l.b16 %v855
    %v1112 = vunpack.c.l.b16 %v856
    %v1113 = vunpack.c.l.b16 %v857
    %v1114 = vunpack.c.l.b16 %v858
    %v1115 = vunpack.c.l.b16 %v859
    %v1116 = vunpack.c.l.b16 %v860
    %v1117 = vunpack.c.l.b16 %v861
    %v1118 = vunpack.c.l.b16 %v862
    %v1119 = vunpack.c.l.b16 %v863
    %v1120 = vunpack.c.l.b16 %v864
    %v1121 = vunpack.c.l.b16 %v865
    %v1122 = vunpack.c.l.b16 %v866
    %v1123 = vunpack.c.l.b16 %v867
    %v1124 = vunpack.c.l.b16 %v868
    %v1125 = vunpack.c.l.b16 %v869
    %v1126 = vunpack.c.l.b16 %v870
    %v1127 = vunpack.c.l.b16 %v871
    %v1128 = vunpack.c.l.b16 %v872
    %v1129 = vunpack.c.l.b16 %v873
    %v1130 = vunpack.c.l.b16 %v874
    %v1131 = vunpack.c.l.b16 %v875
    %v1132 = vunpack.c.l.b16 %v876
    %v1133 = vunpack.c.l.b16 %v877
    %v1134 = vunpack.c.l.b16 %v878
    %v1135 = vunpack.c.l.b16 %v879
    %v1136 = vunpack.c.l.b16 %v880
    %v1137 = vunpack.c.l.b16 %v881
    %v1138 = vunpack.c.l.b16 %v882
    %v1139 = vunpack.c.l.b16 %v883
    %v1140 = vunpack.c.l.b16 %v884
    %v1141 = vunpack.c.l.b16 %v885
    %v1142 = vunpack.c.l.b16 %v886
    %v1143 = vunpack.c.l.b16 %v887
    %v1144 = vunpack.c.l.b16 %v888
    %v1145 = vunpack.c.l.b16 %v889
    %v1146 = vunpack.c.l.b16 %v890
    %v1147 = vunpack.c.l.b16 %v891
    %v1148 = vunpack.c.l.b16 %v892
    %v1149 = vunpack.c.l.b16 %v893
    %v1150 = vunpack.c.l.b16 %v894
    %v1151 = vunpack.c.l.b16 %v895
    %v1152 = vunpack.c.l.b16 %v896
    %v1153 = vunpack.c.l.b16 %v897
    %v1154 = vunpack.c.l.b16 %v898
    %v1155 = vunpack.c.l.b16 %v899
    %v1156 = vunpack.c.l.b16 %v900
    %v1157 = vunpack.c.l.b16 %v901
    %v1158 = vunpack.c.l.b16 %v902
    %v1159 = vunpack.c.l.b16 %v903
    %v1160 = vunpack.c.l.b16 %v904
    %v1161 = vunpack.c.l.b16 %v905
    %v1162 = vunpack.c.l.b16 %v906
    %v1163 = vunpack.c.l.b16 %v907
    %v1164 = vunpack.c.l.b16 %v908
    %v1165 = vunpack.c.l.b16 %v909
    %v1166 = vunpack.c.l.b16 %v910
    %v1167 = vunpack.c.l.b16 %v911
    %v1168 = vunpack.c.l.b16 %v912
    %v1169 = vunpack.c.l.b16 %v913
    %v1170 = vunpack.c.l.b16 %v914
    %v1171 = vunpack.c.l.b16 %v915
    %v1172 = vunpack.c.l.b16 %v916
    %v1173 = vunpack.c.l.b16 %v917
    %v1174 = vunpack.c.l.b16 %v918
    %v1175 = vunpack.c.l.b16 %v919
    %v1176 = vunpack.c.l.b16 %v920
    %v1177 = vunpack.c.l.b16 %v921
    %v1178 = vunpack.c.l.b16 %v922
    %v1179 = vunpack.c.l.b16 %v923
    %v1180 = vunpack.c.l.b16 %v924
    %v1181 = vunpack.c.l.b16 %v925
    %v1182 = vunpack.c.l.b16 %v926
    %v1183 = vunpack.c.l.b16 %v927
    %v1184 = vunpack.c.l.b16 %v928
    %v1185 = vunpack.c.l.b16 %v929
    %v1186 = vunpack.c.l.b16 %v930
    %v1187 = vunpack.c.l.b16 %v931
    %v1188 = vunpack.c.l.b16 %v932
    %v1189 = vunpack.c.l.b16 %v933
    %v1190 = vunpack.c.l.b16 %v934
    %v1191 = vunpack.c.l.b16 %v935
    %v1192 = vunpack.c.l.b16 %v936
    %v1193 = vunpack.c.l.b16 %v937
    %v1194 = vunpack.c.l.b16 %v938
    %v1195 = vunpack.c.l.b16 %v939
    %v1196 = vunpack.c.l.b16 %v940
    %v1197 = vunpack.c.l.b16 %v941
    %v1198 = vunpack.c.l.b16 %v942
    %v1199 = vunpack.c.l.b16 %v943
    %v1200 = vunpack.c.l.b16 %v944
    %v1201 = vunpack.c.l.b16 %v945
    %v1202 = vunpack.c.l.b16 %v946
    %v1203 = vunpack.c.l.b16 %v947
    %v1204 = vunpack.c.l.b16 %v948
    %v1205 = vunpack.c.l.b16 %v949
    %v1206 = vunpack.c.l.b16 %v950
    %v1207 = vunpack.c.l.b16 %v951
    %v1208 = vunpack.c.l.b16 %v952
    %v1209 = vunpack.c.l.b16 %v953
    %v1210 = vunpack.c.l.b16 %v954
    %v1211 = vunpack.c.l.b16 %v955
    %v1212 = vunpack.c.l.b16 %v956
    %v1213 = vunpack.c.l.b16 %v957
    %v1214 = vunpack.c.l.b16 %v958
    %v1215 = vunpack.c.l.b16 %v959
    %v1216 = vunpack.c.l.b16 %v960
    %v1217 = vunpack.c.l.b16 %v961
    %v1218 = vunpack.c.l.b16 %v962
    %v1219 = vunpack.c.l.b16 %v963
    %v1220 = vunpack.c.l.b16 %v964
    %v1221 = vunpack.c.l.b16 %v965
    %v1222 = vunpack.c.l.b16 %v966
    %v1223 = vunpack.c.l.b16 %v967
    %v1224 = vunpack.c.l.b16 %v968
    %v1225 = vunpack.c.l.b16 %v969
    %v1226 = vpack.c.b16 %v1099, %v1098
    %v1227 = vpack.c.b16 %v1101, %v1100
    %v1228 = vpack.c.b16 %v1103, %v1102
    %v1229 = vpack.c.b16 %v1105, %v1104
    %v1230 = vpack.c.b16 %v1107, %v1106
    %v1231 = vpack.c.b16 %v1109, %v1108
    %v1232 = vpack.c.b16 %v1111, %v1110
    %v1233 = vpack.c.b16 %v1113, %v1112
    %v1234 = vpack.c.b16 %v1115, %v1114
    %v1235 = vpack.c.b16 %v1117, %v1116
    %v1236 = vpack.c.b16 %v1119, %v1118
    %v1237 = vpack.c.b16 %v1121, %v1120
    %v1238 = vpack.c.b16 %v1123, %v1122
    %v1239 = vpack.c.b16 %v1125, %v1124
    %v1240 = vpack.c.b16 %v1127, %v1126
    %v1241 = vpack.c.b16 %v1129, %v1128
    %v1242 = vpack.c.b16 %v1131, %v1130
    %v1243 = vpack.c.b16 %v1133, %v1132
    %v1244 = vpack.c.b16 %v1135, %v1134
    %v1245 = vpack.c.b16 %v1137, %v1136
    %v1246 = vpack.c.b16 %v1139, %v1138
    %v1247 = vpack.c.b16 %v1141, %v1140
    %v1248 = vpack.c.b16 %v1143, %v1142
    %v1249 = vpack.c.b16 %v1145, %v1144
    %v1250 = vpack.c.b16 %v1147, %v1146
    %v1251 = vpack.c.b16 %v1149, %v1148
    %v1252 = vpack.c.b16 %v1151, %v1150
    %v1253 = vpack.c.b16 %v1153, %v1152
    %v1254 = vpack.c.b16 %v1155, %v1154
    %v1255 = vpack.c.b16 %v1157, %v1156
    %v1256 = vpack.c.b16 %v1159, %v1158
    %v1257 = vpack.c.b16 %v1161, %v1160
    %v1258 = vpack.c.b16 %v1163, %v1162
    %v1259 = vpack.c.b16 %v1165, %v1164
    %v1260 = vpack.c.b16 %v1167, %v1166
    %v1261 = vpack.c.b16 %v1169, %v1168
    %v1262 = vpack.c.b16 %v1171, %v1170
    %v1263 = vpack.c.b16 %v1173, %v1172
    %v1264 = vpack.c.b16 %v1175, %v1174
    %v1265 = vpack.c.b16 %v1177, %v1176
    %v1266 = vpack.c.b16 %v1179, %v1178
    %v1267 = vpack.c.b16 %v1181, %v1180
    %v1268 = vpack.c.b16 %v1183, %v1182
    %v1269 = vpack.c.b16 %v1185, %v1184
    %v1270 = vpack.c.b16 %v1187, %v1186
    %v1271 = vpack.c.b16 %v1189, %v1188
    %v1272 = vpack.c.b16 %v1191, %v1190
    %v1273 = vpack.c.b16 %v1193, %v1192
    %v1274 = vpack.c.b16 %v1195, %v1194
    %v1275 = vpack.c.b16 %v1197, %v1196
    %v1276 = vpack.c.b16 %v1199, %v1198
    %v1277 = vpack.c.b16 %v1201, %v1200
    %v1278 = vpack.c.b16 %v1203, %v1202
    %v1279 = vpack.c.b16 %v1205, %v1204
    %v1280 = vpack.c.b16 %v1207, %v1206
    %v1281 = vpack.c.b16 %v1209, %v1208
    %v1282 = vpack.c.b16 %v1211, %v1210
    %v1283 = vpack.c.b16 %v1213, %v1212
    %v1284 = vpack.c.b16 %v1215, %v1214
    %v1285 = vpack.c.b16 %v1217, %v1216
    %v1286 = vpack.c.b16 %v1219, %v1218
    %v1287 = vpack.c.b16 %v1221, %v1220
    %v1288 = vpack.c.b16 %v1223, %v1222
    %v1289 = vpack.c.b16 %v1225, %v1224
    %1354 = vmatprep.subr.bf16.mxu0 0
    %1355 = vmatpush1.bf16.msra.mxu0 %v1226
    %1356 = vmatprep.subr.bf16.mxu0 0
    %1357 = vmatpush1.bf16.msra.mxu0 %v1227
    %1358 = vmatprep.subr.bf16.mxu0 0
    %1359 = vmatpush1.bf16.msra.mxu0 %v1228
    %1360 = vmatprep.subr.bf16.mxu0 0
    %1361 = vmatpush1.bf16.msra.mxu0 %v1229
    %1362 = vmatprep.subr.bf16.mxu0 0
    %1363 = vmatpush1.bf16.msra.mxu0 %v1230
    %1364 = vmatprep.subr.bf16.mxu0 0
    %1365 = vmatpush1.bf16.msra.mxu0 %v1231
    %1366 = vmatprep.subr.bf16.mxu0 0
    %1367 = vmatpush1.bf16.msra.mxu0 %v1232
    %1368 = vmatprep.subr.bf16.mxu0 0
    %1369 = vmatpush1.bf16.msra.mxu0 %v1233
    %1370 = vmatprep.subr.bf16.mxu0 0
    %1371 = vmatpush1.bf16.msra.mxu0 %v1234
    %1372 = vmatprep.subr.bf16.mxu0 0
    %1373 = vmatpush1.bf16.msra.mxu0 %v1235
    %1374 = vmatprep.subr.bf16.mxu0 0
    %1375 = vmatpush1.bf16.msra.mxu0 %v1236
    %1376 = vmatprep.subr.bf16.mxu0 0
    %1377 = vmatpush1.bf16.msra.mxu0 %v1237
    %1378 = vmatprep.subr.bf16.mxu0 0
    %1379 = vmatpush1.bf16.msra.mxu0 %v1238
    %1380 = vmatprep.subr.bf16.mxu0 0
    %1381 = vmatpush1.bf16.msra.mxu0 %v1239
    %1382 = vmatprep.subr.bf16.mxu0 0
    %1383 = vmatpush1.bf16.msra.mxu0 %v1240
    %1384 = vmatprep.subr.bf16.mxu0 0
    %1385 = vmatpush1.bf16.msra.mxu0 %v1241
    %1386 = vmatprep.mubr.bf16.mxu0 %v827
    %1387 = vmatmul.mubr.bf16.gmra.mrb[0].mxu0 %v826
    %v1388 = vpop.f32.mrb[0].mxu0
    %v1389 = vadd.f32 0.0, %v1388
    %v1390 = vpop.f32.mrb[0].mxu0
    %v1391 = vpop.f32.mrb[0].mxu0
    %v1392 = vadd.f32 0.0, %v1391
    %v1393 = vpop.f32.mrb[0].mxu0
    %1394 = vmatprep.mubr.bf16.mxu0 %v835
    %1395 = vmatmul.mubr.bf16.gmra.mrb[0].mxu0 %v834
    %v1396 = vpop.f32.mrb[0].mxu0
    %v1397 = vadd.f32 0.0, %v1396
    %v1398 = vpop.f32.mrb[0].mxu0
    %v1399 = vpop.f32.mrb[0].mxu0
    %v1400 = vadd.f32 0.0, %v1399
    %v1401 = vpop.f32.mrb[0].mxu0
    %1402 = vdwg.mxu0
    %1403 = vmatprep.subr.bf16.mxu0 0
    %1404 = vmatpush1.bf16.msra.mxu0 %v1242
    %1405 = vmatprep.subr.bf16.mxu0 0
    %1406 = vmatpush1.bf16.msra.mxu0 %v1243
    %1407 = vmatprep.subr.bf16.mxu0 0
    %1408 = vmatpush1.bf16.msra.mxu0 %v1244
    %1409 = vmatprep.subr.bf16.mxu0 0
    %1410 = vmatpush1.bf16.msra.mxu0 %v1245
    %1411 = vmatprep.subr.bf16.mxu0 0
    %1412 = vmatpush1.bf16.msra.mxu0 %v1246
    %1413 = vmatprep.subr.bf16.mxu0 0
    %1414 = vmatpush1.bf16.msra.mxu0 %v1247
    %1415 = vmatprep.subr.bf16.mxu0 0
    %1416 = vmatpush1.bf16.msra.mxu0 %v1248
    %1417 = vmatprep.subr.bf16.mxu0 0
    %1418 = vmatpush1.bf16.msra.mxu0 %v1249
    %1419 = vmatprep.subr.bf16.mxu0 0
    %1420 = vmatpush1.bf16.msra.mxu0 %v1250
    %1421 = vmatprep.subr.bf16.mxu0 0
    %1422 = vmatpush1.bf16.msra.mxu0 %v1251
    %1423 = vmatprep.subr.bf16.mxu0 0
    %1424 = vmatpush1.bf16.msra.mxu0 %v1252
    %1425 = vmatprep.subr.bf16.mxu0 0
    %1426 = vmatpush1.bf16.msra.mxu0 %v1253
    %1427 = vmatprep.subr.bf16.mxu0 0
    %1428 = vmatpush1.bf16.msra.mxu0 %v1254
    %1429 = vmatprep.subr.bf16.mxu0 0
    %1430 = vmatpush1.bf16.msra.mxu0 %v1255
    %1431 = vmatprep.subr.bf16.mxu0 0
    %1432 = vmatpush1.bf16.msra.mxu0 %v1256
    %1433 = vmatprep.subr.bf16.mxu0 0
    %1434 = vmatpush1.bf16.msra.mxu0 %v1257
    %1435 = vmatprep.mubr.bf16.mxu0 %v829
    %1436 = vmatmul.mubr.bf16.gmra.mrb[0].mxu0 %v828
    %v1437 = vpop.f32.mrb[0].mxu0
    %v1438 = vadd.f32 %v1389, %v1437
    %v1439 = vpop.f32.mrb[0].mxu0
    %v1440 = vpop.f32.mrb[0].mxu0
    %v1441 = vadd.f32 %v1392, %v1440
    %v1442 = vpop.f32.mrb[0].mxu0
    %1443 = vmatprep.mubr.bf16.mxu0 %v837
    %1444 = vmatmul.mubr.bf16.gmra.mrb[0].mxu0 %v836
    %v1445 = vpop.f32.mrb[0].mxu0
    %v1446 = vadd.f32 %v1397, %v1445
    %v1447 = vpop.f32.mrb[0].mxu0
    %v1448 = vpop.f32.mrb[0].mxu0
    %v1449 = vadd.f32 %v1400, %v1448
    %v1450 = vpop.f32.mrb[0].mxu0
    %1451 = vdwg.mxu0
    %1452 = vmatprep.subr.bf16.mxu0 0
    %1453 = vmatpush1.bf16.msra.mxu0 %v1258
    %1454 = vmatprep.subr.bf16.mxu0 0
    %1455 = vmatpush1.bf16.msra.mxu0 %v1259
    %1456 = vmatprep.subr.bf16.mxu0 0
    %1457 = vmatpush1.bf16.msra.mxu0 %v1260
    %1458 = vmatprep.subr.bf16.mxu0 0
    %1459 = vmatpush1.bf16.msra.mxu0 %v1261
    %1460 = vmatprep.subr.bf16.mxu0 0
    %1461 = vmatpush1.bf16.msra.mxu0 %v1262
    %1462 = vmatprep.subr.bf16.mxu0 0
    %1463 = vmatpush1.bf16.msra.mxu0 %v1263
    %1464 = vmatprep.subr.bf16.mxu0 0
    %1465 = vmatpush1.bf16.msra.mxu0 %v1264
    %1466 = vmatprep.subr.bf16.mxu0 0
    %1467 = vmatpush1.bf16.msra.mxu0 %v1265
    %1468 = vmatprep.subr.bf16.mxu0 0
    %1469 = vmatpush1.bf16.msra.mxu0 %v1266
    %1470 = vmatprep.subr.bf16.mxu0 0
    %1471 = vmatpush1.bf16.msra.mxu0 %v1267
    %1472 = vmatprep.subr.bf16.mxu0 0
    %1473 = vmatpush1.bf16.msra.mxu0 %v1268
    %1474 = vmatprep.subr.bf16.mxu0 0
    %1475 = vmatpush1.bf16.msra.mxu0 %v1269
    %1476 = vmatprep.subr.bf16.mxu0 0
    %1477 = vmatpush1.bf16.msra.mxu0 %v1270
    %1478 = vmatprep.subr.bf16.mxu0 0
    %1479 = vmatpush1.bf16.msra.mxu0 %v1271
    %1480 = vmatprep.subr.bf16.mxu0 0
    %1481 = vmatpush1.bf16.msra.mxu0 %v1272
    %1482 = vmatprep.subr.bf16.mxu0 0
    %1483 = vmatpush1.bf16.msra.mxu0 %v1273
    %1484 = vmatprep.mubr.bf16.mxu0 %v831
    %1485 = vmatmul.mubr.bf16.gmra.mrb[0].mxu0 %v830
    %v1486 = vpop.f32.mrb[0].mxu0
    %v1487 = vadd.f32 %v1438, %v1486
    %v1488 = vpop.f32.mrb[0].mxu0
    %v1489 = vpop.f32.mrb[0].mxu0
    %v1490 = vadd.f32 %v1441, %v1489
    %v1491 = vpop.f32.mrb[0].mxu0
    %1492 = vmatprep.mubr.bf16.mxu0 %v839
    %1493 = vmatmul.mubr.bf16.gmra.mrb[0].mxu0 %v838
    %v1494 = vpop.f32.mrb[0].mxu0
    %v1495 = vadd.f32 %v1446, %v1494
    %v1496 = vpop.f32.mrb[0].mxu0
    %v1497 = vpop.f32.mrb[0].mxu0
    %v1498 = vadd.f32 %v1449, %v1497
    %v1499 = vpop.f32.mrb[0].mxu0
    %1500 = vdwg.mxu0
    %1501 = vmatprep.subr.bf16.mxu0 0
    %1502 = vmatpush1.bf16.msra.mxu0 %v1274
    %1503 = vmatprep.subr.bf16.mxu0 0
    %1504 = vmatpush1.bf16.msra.mxu0 %v1275
    %1505 = vmatprep.subr.bf16.mxu0 0
    %1506 = vmatpush1.bf16.msra.mxu0 %v1276
    %1507 = vmatprep.subr.bf16.mxu0 0
    %1508 = vmatpush1.bf16.msra.mxu0 %v1277
    %1509 = vmatprep.subr.bf16.mxu0 0
    %1510 = vmatpush1.bf16.msra.mxu0 %v1278
    %1511 = vmatprep.subr.bf16.mxu0 0
    %1512 = vmatpush1.bf16.msra.mxu0 %v1279
    %1513 = vmatprep.subr.bf16.mxu0 0
    %1514 = vmatpush1.bf16.msra.mxu0 %v1280
    %1515 = vmatprep.subr.bf16.mxu0 0
    %1516 = vmatpush1.bf16.msra.mxu0 %v1281
    %1517 = vmatprep.subr.bf16.mxu0 0
    %1518 = vmatpush1.bf16.msra.mxu0 %v1282
    %1519 = vmatprep.subr.bf16.mxu0 0
    %1520 = vmatpush1.bf16.msra.mxu0 %v1283
    %1521 = vmatprep.subr.bf16.mxu0 0
    %1522 = vmatpush1.bf16.msra.mxu0 %v1284
    %1523 = vmatprep.subr.bf16.mxu0 0
    %1524 = vmatpush1.bf16.msra.mxu0 %v1285
    %1525 = vmatprep.subr.bf16.mxu0 0
    %1526 = vmatpush1.bf16.msra.mxu0 %v1286
    %1527 = vmatprep.subr.bf16.mxu0 0
    %1528 = vmatpush1.bf16.msra.mxu0 %v1287
    %1529 = vmatprep.subr.bf16.mxu0 0
    %1530 = vmatpush1.bf16.msra.mxu0 %v1288
    %1531 = vmatprep.subr.bf16.mxu0 0
    %1532 = vmatpush1.bf16.msra.mxu0 %v1289
    %1533 = vmatprep.mubr.bf16.mxu0 %v833
    %1534 = vmatmul.mubr.bf16.gmra.mrb[0].mxu0 %v832
    %v1535 = vpop.f32.mrb[0].mxu0
    %v1536 = vadd.f32 %v1487, %v1535
    %v1537 = vpop.f32.mrb[0].mxu0
    %v1538 = vpop.f32.mrb[0].mxu0
    %v1539 = vadd.f32 %v1490, %v1538
    %v1540 = vpop.f32.mrb[0].mxu0
    %1541 = vmatprep.mubr.bf16.mxu0 %v841
    %1542 = vmatmul.mubr.bf16.gmra.mrb[0].mxu0 %v840
    %v1543 = vpop.f32.mrb[0].mxu0
    %v1544 = vadd.f32 %v1495, %v1543
    %v1545 = vpop.f32.mrb[0].mxu0
    %v1546 = vpop.f32.mrb[0].mxu0
    %v1547 = vadd.f32 %v1498, %v1546
    %v1548 = vpop.f32.mrb[0].mxu0
    %1549 = vdwg.mxu0
    %v1550 = vadd.f32 %v1536, %v1539
    %v1551 = vadd.f32 %v1550, %v1544
    %v1552 = vadd.f32 %v1551, %v1547
    %v1553 = vrot.slane %v1552, 4
    %v1554 = vadd.f32 %v1552, %v1553
    %v1555 = vrot.slane %v1554, 2
    %v1556 = vadd.f32 %v1554, %v1555
    %v1557 = vrot.slane %v1556, 1
    %v1558 = vadd.f32 %v1556, %v1557
    %v1559 = vmul.f32 %v1558, 0.03125
    %v1560 = vmul.f32 %v1536, %v1536
    %v1561 = vmul.f32 %v1539, %v1539
    %v1562 = vmul.f32 %v1544, %v1544
    %v1563 = vmul.f32 %v1547, %v1547
    %v1564 = vadd.f32 %v1560, %v1561
    %v1565 = vadd.f32 %v1564, %v1562
    %v1566 = vadd.f32 %v1565, %v1563
    %v1567 = vrot.slane %v1566, 4
    %v1568 = vadd.f32 %v1566, %v1567
    %v1569 = vrot.slane %v1568, 2
    %v1570 = vadd.f32 %v1568, %v1569
    %v1571 = vrot.slane %v1570, 1
    %v1572 = vadd.f32 %v1570, %v1571
    %v1573 = vmul.f32 %v1572, 0.03125
    %v1574 = vmul.f32 %v1559, %v1559
    %v1575 = vsub.f32 %v1573, %v1574
    %v1576 = vmax.f32 %v1575, 0.0
    %v1577 = vadd.f32 %v1576, 1e-05
    %v1578 = vrsqrt.pop %v1577
    %v1579 = vld [vmem:[%s5] sm:$0x1]
    %v1580 = vmul.f32 %v1578, %v1579
    %v1581 = vld [vmem:[%s6] sm:$0x1]
    %v1582 = vmul.f32 %v1559, %v1580
    %v1583 = vsub.f32 %v1581, %v1582
    %v1584 = vlaneseq
    %v1585 = vshrl.u32 %v1584, 7
    %v1586 = vsub.s32 0, %v1585
    %v1587 = vrot.slane %v1580, %v1586
    %v1588 = vmul.f32 %v1536, %v1587
    %v1589 = vmul.f32 %v1539, %v1587
    %v1590 = vmul.f32 %v1544, %v1587
    %v1591 = vmul.f32 %v1547, %v1587
    %v1593 = vlaneseq
    %v1594 = vshrl.u32 %v1593, 7
    %v1595 = vsub.s32 0, %v1594
    %v1596 = vrot.slane %v1583, %v1595
    %v1598 = vadd.f32 %v1588, %v1596
    %v1599 = vadd.f32 %v1589, %v1596
    %v1600 = vadd.f32 %v1590, %v1596
    %v1601 = vadd.f32 %v1591, %v1596
    %v1602 = vmul.f32 %v1598, 0.5
    %v1603 = vmul.f32 %v1599, 0.5
    %v1604 = vmul.f32 %v1600, 0.5
    %v1605 = vmul.f32 %v1601, 0.5
    %v1606 = vmul.f32 %v1598, 0.70710677
    %v1607 = vmul.f32 %v1599, 0.70710677
    %v1608 = vmul.f32 %v1600, 0.70710677
    %v1609 = vmul.f32 %v1601, 0.70710677
    %v1610 = verf.f32.pop %v1606
    %v1611 = verf.f32.pop %v1607
    %v1612 = verf.f32.pop %v1608
    %v1613 = verf.f32.pop %v1609
    %v1614 = vadd.f32 %v1610, 1.0
    %v1615 = vadd.f32 %v1611, 1.0
    %v1616 = vadd.f32 %v1612, 1.0
    %v1617 = vadd.f32 %v1613, 1.0
    %v1618 = vmul.f32 %v1602, %v1614
    %v1619 = vmul.f32 %v1603, %v1615
    %v1620 = vmul.f32 %v1604, %v1616
    %v1621 = vmul.f32 %v1605, %v1617
    %1622 = vst [vmem:[#allocation7] sm:$0xff] %v1618
    %1623 = vst [vmem:[#allocation7 + $0x8] sm:$0xff] %v1619
    %1624 = vst [vmem:[#allocation7 + $0x10] sm:$0xff] %v1620
    %1625 = vst [vmem:[#allocation7 + $0x18] sm:$0xff] %v1621
    // Predicated region
    $region38: #{tpu_custom_call.1} parent=1 // pred_check
      _
    $region39: #{tpu_custom_call.1} parent=1 // pred_check_branch
      %1627 = sbr.rel (0) target = $region41
    $region40: #{tpu_custom_call.1} parent=1 // pred_region
      %s1629 = ssub.s32 512, 512
      %1630 = vsyncadd [#allocation4], %s1629
      %s1631 = sshll.u32 [#allocation7], 4
      %s1632 = int_to_ptr.vmem [resolvable:$true] %s1631
      %1637 = dma.vmem_to_hbm [thread:$0]  %s1632, 512, %s7, [#allocation4], 128, 128, 8
    $region41: #{tpu_custom_call.1} parent=1 // pred_fallthru
      _
    // Predicated region
    $region42: #{tpu_custom_call.1} parent=1 // pred_check
      _
    $region43: #{tpu_custom_call.1} parent=1 // pred_check_branch
      %1639 = sbr.rel (0) target = $region45
    $region44: #{tpu_custom_call.1} parent=1 // pred_region
      %1640 = dma.done [#allocation4], 512
    $region45: #{tpu_custom_call.1} parent=1 // pred_fallthru
      _
    %1641 = vsyncpa [#allocation3], 1
    %1642 = vsyncpa [#allocation6], 1
    %1643 = vsyncpa [#allocation4], 1

</llo_original>
